<compile_context>
chip_gen: v5e
topology: v5e:2x2
jax: 0.10.0
libtpu: 0.0.40
codegen_flags: <defaults>
</compile_context>

<pallas_src>
import jax
import jax.numpy as jnp
from jax.experimental import pallas as pl
from jax.experimental.pallas import tpu as pltpu

# ----------------------------- configuration --------------------------------
B = 2          # batch
C = 3          # input channels (RGB)
H_ORI = 14     # original image height (not a multiple of patch -> exercises padding)
W_ORI = 14
P = 4          # patch size
D = 32         # model dim
N_HEADS = 2
N_LAYERS = 2
MLP_DIM = 4 * D
N_CLS = 4
DISTILLED = 0  # encoder.distilled
DH = D // N_HEADS
SCALE = DH ** -0.5
LN_EPS = 1e-5  # PyTorch nn.LayerNorm default

H_PAD = ((H_ORI + P - 1) // P) * P
W_PAD = ((W_ORI + P - 1) // P) * P
N_PATCH = (H_PAD // P) * (W_PAD // P)
SEQ = 1 + DISTILLED + N_PATCH


# ------------------------------ in-kernel helpers ----------------------------
def _ln(x, g, b):
    x = x.astype(jnp.float32)
    mu = jnp.mean(x, axis=-1, keepdims=True)
    var = jnp.mean((x - mu) * (x - mu), axis=-1, keepdims=True)
    return (x - mu) * jax.lax.rsqrt(var + LN_EPS) * g + b


def _gelu(x):
    # TODO(synk): PyTorch nn.GELU default is exact erf-GELU; tanh approximation used here.
    return 0.5 * x * (1.0 + jnp.tanh(0.7978845608028654 * (x + 0.044715 * x * x * x)))


# ------------------------------ fused kernel ---------------------------------
def _segmenter_kernel(
    patches_ref, pw_ref, posx_ref, abias_ref,
    ln1g_ref, ln1b_ref, qkvw_ref, qkvb_ref, projw_ref, projb_ref,
    ln2g_ref, ln2b_ref, fc1w_ref, fc1b_ref, fc2w_ref, fc2b_ref,
    ng_ref, nb_ref, hwt_ref, hbt_ref, akront_ref,
    o_ref,
):
    # ---- patch embedding + cls token + positional embedding (single matmul + add)
    # patches has an all-zero row per image at the cls position; posx carries
    # cls_token + pos[0] for those rows and patch_b + pos[1+i] for patch rows.
    x = jnp.dot(patches_ref[...], pw_ref[...],
                preferred_element_type=jnp.float32) + posx_ref[...]      # (B*SEQ, D) f32

    abias = abias_ref[...]   # (B*SEQ, B*SEQ): 0 within an image, -1e30 across images

    # ---- transformer blocks (statically unrolled; all weights VMEM-resident)
    for l in range(N_LAYERS):
        # attention sub-block (pre-norm); bf16 operands, f32 accumulation
        xn = _ln(x, ln1g_ref[l], ln1b_ref[l]).astype(jnp.bfloat16)
        qkv = jnp.dot(xn, qkvw_ref[l],
                      preferred_element_type=jnp.float32) + qkvb_ref[l]  # (BS, 3D) f32
        projw = projw_ref[l]                                             # (D, D) bf16
        attn = None
        for h in range(N_HEADS):                      # heads via static lane slices
            q = qkv[:, h * DH:(h + 1) * DH].astype(jnp.bfloat16)
            k = qkv[:, D + h * DH:D + (h + 1) * DH].astype(jnp.bfloat16)
            v = qkv[:, 2 * D + h * DH:2 * D + (h + 1) * DH].astype(jnp.bfloat16)
            s = jax.lax.dot_general(q, k, (((1,), (1,)), ((), ())),
                                    preferred_element_type=jnp.float32) * SCALE + abias
            m = jnp.max(s, axis=-1, keepdims=True)
            p = jnp.exp(s - m)
            p = p * pl.reciprocal(jnp.sum(p, axis=-1, keepdims=True), approx=True)
            o_h = jnp.dot(p.astype(jnp.bfloat16), v,
                          preferred_element_type=jnp.float32)            # (BS, DH)
            # fold the output projection per head (avoids lane-concat of heads)
            c = jnp.dot(o_h.astype(jnp.bfloat16), projw[h * DH:(h + 1) * DH, :],
                        preferred_element_type=jnp.float32)
            attn = c if attn is None else attn + c
        x = x + attn + projb_ref[l]

        # MLP sub-block (pre-norm)
        xn = _ln(x, ln2g_ref[l], ln2b_ref[l]).astype(jnp.bfloat16)
        h1 = jnp.dot(xn, fc1w_ref[l],
                     preferred_element_type=jnp.float32) + fc1b_ref[l]
        h1 = _gelu(h1).astype(jnp.bfloat16)
        h2 = jnp.dot(h1, fc2w_ref[l],
                     preferred_element_type=jnp.float32) + fc2b_ref[l]
        x = x + h2

    # ---- final LN + decoder head + bilinear upsample (transposed, lane-dense output)
    xf = _ln(x, ng_ref[...], nb_ref[...])
    hwt = hwt_ref[...]          # (N_CLS, D)      = head_w^T
    hbt = hbt_ref[...]          # (N_CLS, 1)      = head_b^T
    akront = akront_ref[...]    # (N_PATCH, H*W)  = (a_h (x) a_w)^T
    for bi in range(B):
        r0 = bi * SEQ + 1 + DISTILLED                 # strip cls (+dist) tokens
        tokens = xf[r0:r0 + N_PATCH, :]               # (N_PATCH, D)
        # logits^T = head_w^T @ tokens^T  -> (N_CLS, N_PATCH); rhs-transposed matmul
        logits_t = jax.lax.dot_general(hwt, tokens, (((1,), (1,)), ((), ())),
                                       preferred_element_type=jnp.float32) + hbt
        up_t = jnp.dot(logits_t, akront,
                       preferred_element_type=jnp.float32)   # (N_CLS, H*W) lane-dense
        o_ref[bi] = up_t.astype(o_ref.dtype)


# ------------------------------- model pieces --------------------------------
def interp_matrix(out_size, in_size):
    """Row matrix implementing 1-D linear interp with align_corners=True (PyTorch)."""
    if in_size == 1:
        return jnp.ones((out_size, 1), jnp.float32)
    if out_size == 1:
        return jnp.zeros((1, in_size), jnp.float32).at[0, 0].set(1.0)
    src = jnp.arange(out_size, dtype=jnp.float32) * (in_size - 1) / (out_size - 1)
    i0 = jnp.clip(jnp.floor(src).astype(jnp.int32), 0, in_size - 2)
    frac = src - i0.astype(jnp.float32)
    rows = jnp.arange(out_size)
    A = jnp.zeros((out_size, in_size), jnp.float32)
    A = A.at[rows, i0].add(1.0 - frac)
    A = A.at[rows, i0 + 1].add(frac)
    return A


def segmenter_forward(im, params):
    b, c, h_ori, w_ori = im.shape

    # padding(im, patch_size): pad bottom/right with zeros to multiple of P
    pad_h = (-h_ori) % P
    pad_w = (-w_ori) % P
    im_p = jnp.pad(im, ((0, 0), (0, 0), (0, pad_h), (0, pad_w)))
    H, W = h_ori + pad_h, w_ori + pad_w
    gh, gw = H // P, W // P
    n_patch = gh * gw
    seq = 1 + DISTILLED + n_patch
    bs = b * seq

    # patch extraction (conv PxP stride P == matmul over flattened (c, ph, pw) patches),
    # with an all-zero "cls row" inserted per image so the kernel's single
    # patch-embed matmul + posx add produces the complete initial residual.
    patches = (im_p.reshape(b, c, gh, P, gw, P)
               .transpose(0, 2, 4, 1, 3, 5)
               .reshape(b, n_patch, c * P * P))
    patches_z = jnp.concatenate(
        [jnp.zeros((b, 1, c * P * P), patches.dtype), patches], axis=1
    ).reshape(bs, c * P * P)

    # per-row additive term: cls_token + pos[0] for cls rows, patch_b + pos[1+i] else
    pos = params["pos_embed"].reshape(seq, D)
    cls = params["cls_token"].reshape(1, D)
    posx = jnp.concatenate([cls + pos[0:1], pos[1:] + params["patch_b"]], axis=0)
    posx = jnp.tile(posx, (b, 1))                                   # (bs, D)

    # additive attention bias that blocks cross-image attention (batch folded in M)
    same_img = jnp.kron(jnp.eye(b, dtype=jnp.float32),
                        jnp.ones((seq, seq), jnp.float32))
    abias = (1.0 - same_img) * jnp.float32(-1e30)                   # (bs, bs)

    # bilinear align_corners=True upsample, transposed so the output is lane-dense.
    # TODO(synk): at real resolutions replace the Kronecker matrix with two separable
    # matmuls (a_h then a_w); at this toy size the fused (n_patch, H*W) matrix is tiny.
    a_h = interp_matrix(H, gh)                                      # (H, gh)
    a_w = interp_matrix(W, gw)                                      # (W, gw)
    akront = jnp.einsum("hk,wl->klhw", a_h, a_w).reshape(n_patch, H * W)

    # stacked per-layer weights; matmul weights held as bf16 (f32 accumulation in-kernel)
    stk = {k: jnp.stack([blk[k] for blk in params["blocks"]])
           for k in params["blocks"][0]}
    for k in ("qkv_w", "proj_w", "fc1_w", "fc2_w"):
        stk[k] = stk[k].astype(jnp.bfloat16)

    head_wt = params["head_w"].T                                    # (N_CLS, D)
    head_bt = params["head_b"].reshape(N_CLS, 1)                    # (N_CLS, 1)

    inputs = [
        patches_z, params["patch_w"], posx, abias,
        stk["ln1_g"], stk["ln1_b"], stk["qkv_w"], stk["qkv_b"],
        stk["proj_w"], stk["proj_b"], stk["ln2_g"], stk["ln2_b"],
        stk["fc1_w"], stk["fc1_b"], stk["fc2_w"], stk["fc2_b"],
        params["norm_g"], params["norm_b"], head_wt, head_bt,
        akront,
    ]
    vmem = pl.BlockSpec(memory_space=pltpu.MemorySpace.VMEM)

    out = pl.pallas_call(
        _segmenter_kernel,
        out_shape=jax.ShapeDtypeStruct((b, N_CLS, H * W), jnp.float32),
        in_specs=[vmem] * len(inputs),
        out_specs=vmem,
    )(*inputs)

    # (b, n_cls, H*W) is already NCHW flattened -> just reshape and unpad (no transpose)
    return out.reshape(b, N_CLS, H, W)[:, :, :h_ori, :w_ori]


# --------------------------- pure-JAX reference ------------------------------
def segmenter_reference(im, params):
    b, c, h_ori, w_ori = im.shape
    pad_h = (-h_ori) % P
    pad_w = (-w_ori) % P
    im_p = jnp.pad(im, ((0, 0), (0, 0), (0, pad_h), (0, pad_w)))
    H, W = h_ori + pad_h, w_ori + pad_w
    gh, gw = H // P, W // P
    patches = (im_p.reshape(b, c, gh, P, gw, P)
               .transpose(0, 2, 4, 1, 3, 5)
               .reshape(b, gh * gw, c * P * P))
    x = patches @ params["patch_w"] + params["patch_b"]
    cls = jnp.broadcast_to(params["cls_token"], (b, 1, D))
    x = jnp.concatenate([cls, x], axis=1) + params["pos_embed"]

    def ln(t, g, bb):
        mu = t.mean(-1, keepdims=True)
        var = ((t - mu) ** 2).mean(-1, keepdims=True)
        return (t - mu) / jnp.sqrt(var + LN_EPS) * g + bb

    for blk in params["blocks"]:
        xn = ln(x, blk["ln1_g"], blk["ln1_b"])
        qkv = xn @ blk["qkv_w"] + blk["qkv_b"]
        q, k, v = jnp.split(qkv, 3, axis=-1)

        def sh(t):
            return t.reshape(b, -1, N_HEADS, DH).transpose(0, 2, 1, 3)

        q, k, v = sh(q), sh(k), sh(v)
        s = jnp.einsum("bhqd,bhkd->bhqk", q, k) * SCALE
        p = jax.nn.softmax(s, axis=-1)
        o = jnp.einsum("bhqk,bhkd->bhqd", p, v)
        o = o.transpose(0, 2, 1, 3).reshape(b, -1, D)
        x = x + o @ blk["proj_w"] + blk["proj_b"]

        xn = ln(x, blk["ln2_g"], blk["ln2_b"])
        h1 = xn @ blk["fc1_w"] + blk["fc1_b"]
        h1 = 0.5 * h1 * (1.0 + jnp.tanh(0.7978845608028654 * (h1 + 0.044715 * h1 ** 3)))
        x = x + h1 @ blk["fc2_w"] + blk["fc2_b"]

    x = ln(x, params["norm_g"], params["norm_b"])
    x = x[:, 1 + DISTILLED:]
    masks = x @ params["head_w"] + params["head_b"]
    masks = masks.reshape(b, gh, gw, N_CLS).transpose(0, 3, 1, 2)
    a_h = interp_matrix(H, gh)
    a_w = interp_matrix(W, gw)
    up = jnp.einsum("hk,bckl,wl->bchw", a_h, masks, a_w)
    return up[:, :, :h_ori, :w_ori]


# ------------------------------- parameters ----------------------------------
def init_params(key):
    keys = iter(jax.random.split(key, 8 + 8 * N_LAYERS))

    def nrm(shape):
        return 0.02 * jax.random.normal(next(keys), shape, jnp.float32)

    params = {
        "patch_w": nrm((C * P * P, D)),
        "patch_b": jnp.zeros((1, D), jnp.float32),
        "cls_token": nrm((1, 1, D)),
        "pos_embed": nrm((1, SEQ, D)),
        "norm_g": jnp.ones((1, D), jnp.float32),
        "norm_b": jnp.zeros((1, D), jnp.float32),
        "head_w": nrm((D, N_CLS)),
        "head_b": jnp.zeros((1, N_CLS), jnp.float32),
        "blocks": [],
    }
    for _ in range(N_LAYERS):
        params["blocks"].append({
            "ln1_g": jnp.ones((1, D), jnp.float32),
            "ln1_b": jnp.zeros((1, D), jnp.float32),
            "qkv_w": nrm((D, 3 * D)),
            "qkv_b": jnp.zeros((1, 3 * D), jnp.float32),
            "proj_w": nrm((D, D)),
            "proj_b": jnp.zeros((1, D), jnp.float32),
            "ln2_g": jnp.ones((1, D), jnp.float32),
            "ln2_b": jnp.zeros((1, D), jnp.float32),
            "fc1_w": nrm((D, MLP_DIM)),
            "fc1_b": jnp.zeros((1, MLP_DIM), jnp.float32),
            "fc2_w": nrm((MLP_DIM, D)),
            "fc2_b": jnp.zeros((1, D), jnp.float32),
        })
    return params


# ---------------------------------- main --------------------------------------
if __name__ == "__main__":
    key = jax.random.PRNGKey(0)
    k_params, k_im = jax.random.split(key)
    params = init_params(k_params)
    im = jax.random.normal(k_im, (B, C, H_ORI, W_ORI), jnp.float32)   # NCHW like PyTorch

    fwd = jax.jit(segmenter_forward)
    masks = jax.block_until_ready(fwd(im, params))

    assert masks.shape == (B, N_CLS, H_ORI, W_ORI), masks.shape
    assert masks.dtype == jnp.float32
    assert bool(jnp.all(jnp.isfinite(masks)))

    ref = jax.block_until_ready(jax.jit(segmenter_reference)(im, params))
    max_err = float(jnp.max(jnp.abs(masks - ref)))
    assert bool(jnp.allclose(masks, ref, atol=1e-2, rtol=1e-2)), max_err

    print("KERNEL_OK")
</pallas_src>

<mosaic_0001>
module attributes {stable_mosaic.version = 11 : i64} {
  func.func @_segmenter_kernel(%arg0: memref<34x48xf32, #tpu.memory_space<vmem>>, %arg1: memref<48x32xf32, #tpu.memory_space<vmem>>, %arg2: memref<34x32xf32, #tpu.memory_space<vmem>>, %arg3: memref<34x34xf32, #tpu.memory_space<vmem>>, %arg4: memref<2x1x32xf32, #tpu.memory_space<vmem>>, %arg5: memref<2x1x32xf32, #tpu.memory_space<vmem>>, %arg6: memref<2x32x96xbf16, #tpu.memory_space<vmem>>, %arg7: memref<2x1x96xf32, #tpu.memory_space<vmem>>, %arg8: memref<2x32x32xbf16, #tpu.memory_space<vmem>>, %arg9: memref<2x1x32xf32, #tpu.memory_space<vmem>>, %arg10: memref<2x1x32xf32, #tpu.memory_space<vmem>>, %arg11: memref<2x1x32xf32, #tpu.memory_space<vmem>>, %arg12: memref<2x32x128xbf16, #tpu.memory_space<vmem>>, %arg13: memref<2x1x128xf32, #tpu.memory_space<vmem>>, %arg14: memref<2x128x32xbf16, #tpu.memory_space<vmem>>, %arg15: memref<2x1x32xf32, #tpu.memory_space<vmem>>, %arg16: memref<1x32xf32, #tpu.memory_space<vmem>>, %arg17: memref<1x32xf32, #tpu.memory_space<vmem>>, %arg18: memref<4x32xf32, #tpu.memory_space<vmem>>, %arg19: memref<4x1xf32, #tpu.memory_space<vmem>>, %arg20: memref<16x256xf32, #tpu.memory_space<vmem>>, %arg21: memref<2x4x256xf32, #tpu.memory_space<vmem>>) attributes {dimension_semantics = [], scalar_prefetch = 0 : i64, scratch_operands = 0 : i64, tpu.core_type = #tpu.core_type<tc>} {
    %c0 = arith.constant 0 : index
    %c0_0 = arith.constant 0 : index
    %0 = vector.load %arg0[%c0, %c0_0] : memref<34x48xf32, #tpu.memory_space<vmem>>, vector<34x48xf32>
    %c0_1 = arith.constant 0 : index
    %c0_2 = arith.constant 0 : index
    %1 = vector.load %arg1[%c0_1, %c0_2] : memref<48x32xf32, #tpu.memory_space<vmem>>, vector<48x32xf32>
    %cst = arith.constant dense<0.000000e+00> : vector<34x32xf32>
    %2 = tpu.matmul %0, %1, %cst {dimension_numbers = #tpu.dot_dimension_numbers<[1], [0], [0], [1], [0, 0, 1, 1], [], []>} : vector<34x48xf32>, vector<48x32xf32>, vector<34x32xf32> -> vector<34x32xf32>
    %c0_3 = arith.constant 0 : index
    %c0_4 = arith.constant 0 : index
    %3 = vector.load %arg2[%c0_3, %c0_4] : memref<34x32xf32, #tpu.memory_space<vmem>>, vector<34x32xf32>
    %4 = arith.addf %2, %3 : vector<34x32xf32>
    %c0_5 = arith.constant 0 : index
    %c0_6 = arith.constant 0 : index
    %5 = vector.load %arg3[%c0_5, %c0_6] : memref<34x34xf32, #tpu.memory_space<vmem>>, vector<34x34xf32>
    %c0_7 = arith.constant 0 : index
    %c0_8 = arith.constant 0 : index
    %c0_9 = arith.constant 0 : index
    %6 = vector.load %arg4[%c0_7, %c0_8, %c0_9] : memref<2x1x32xf32, #tpu.memory_space<vmem>>, vector<1x1x32xf32>
    %7 = vector.shape_cast %6 : vector<1x1x32xf32> to vector<1x32xf32>
    %c0_10 = arith.constant 0 : index
    %c0_11 = arith.constant 0 : index
    %c0_12 = arith.constant 0 : index
    %8 = vector.load %arg5[%c0_10, %c0_11, %c0_12] : memref<2x1x32xf32, #tpu.memory_space<vmem>>, vector<1x1x32xf32>
    %9 = vector.shape_cast %8 : vector<1x1x32xf32> to vector<1x32xf32>
    %cst_13 = arith.constant dense<0.000000e+00> : vector<34xf32>
    %10 = vector.multi_reduction <add>, %4, %cst_13 [1] : vector<34x32xf32> to vector<34xf32>
    %11 = vector.shape_cast %10 : vector<34xf32> to vector<34x1xf32>
    %cst_14 = arith.constant 3.200000e+01 : f32
    %12 = vector.broadcast %cst_14 : f32 to vector<34x1xf32>
    %13 = arith.divf %11, %12 : vector<34x1xf32>
    %14 = vector.broadcast %13 : vector<34x1xf32> to vector<34x32xf32>
    %15 = arith.subf %4, %14 : vector<34x32xf32>
    %16 = vector.broadcast %13 : vector<34x1xf32> to vector<34x32xf32>
    %17 = arith.subf %4, %16 : vector<34x32xf32>
    %18 = arith.mulf %15, %17 : vector<34x32xf32>
    %cst_15 = arith.constant dense<0.000000e+00> : vector<34xf32>
    %19 = vector.multi_reduction <add>, %18, %cst_15 [1] : vector<34x32xf32> to vector<34xf32>
    %20 = vector.shape_cast %19 : vector<34xf32> to vector<34x1xf32>
    %cst_16 = arith.constant 3.200000e+01 : f32
    %21 = vector.broadcast %cst_16 : f32 to vector<34x1xf32>
    %22 = arith.divf %20, %21 : vector<34x1xf32>
    %23 = vector.broadcast %13 : vector<34x1xf32> to vector<34x32xf32>
    %24 = arith.subf %4, %23 : vector<34x32xf32>
    %cst_17 = arith.constant 9.99999974E-6 : f32
    %25 = vector.broadcast %cst_17 : f32 to vector<34x1xf32>
    %26 = arith.addf %22, %25 : vector<34x1xf32>
    %27 = math.rsqrt %26 : vector<34x1xf32>
    %28 = vector.broadcast %27 : vector<34x1xf32> to vector<34x32xf32>
    %29 = arith.mulf %24, %28 : vector<34x32xf32>
    %30 = vector.broadcast %7 : vector<1x32xf32> to vector<34x32xf32>
    %31 = arith.mulf %29, %30 : vector<34x32xf32>
    %32 = vector.broadcast %9 : vector<1x32xf32> to vector<34x32xf32>
    %33 = arith.addf %31, %32 : vector<34x32xf32>
    %34 = arith.truncf %33 : vector<34x32xf32> to vector<34x32xbf16>
    %c0_18 = arith.constant 0 : index
    %c0_19 = arith.constant 0 : index
    %c0_20 = arith.constant 0 : index
    %35 = vector.load %arg6[%c0_18, %c0_19, %c0_20] : memref<2x32x96xbf16, #tpu.memory_space<vmem>>, vector<1x32x96xbf16>
    %36 = vector.shape_cast %35 : vector<1x32x96xbf16> to vector<32x96xbf16>
    %cst_21 = arith.constant dense<0.000000e+00> : vector<34x96xf32>
    %37 = tpu.matmul %34, %36, %cst_21 {dimension_numbers = #tpu.dot_dimension_numbers<[1], [0], [0], [1], [0, 0, 1, 1], [], []>} : vector<34x32xbf16>, vector<32x96xbf16>, vector<34x96xf32> -> vector<34x96xf32>
    %c0_22 = arith.constant 0 : index
    %c0_23 = arith.constant 0 : index
    %c0_24 = arith.constant 0 : index
    %38 = vector.load %arg7[%c0_22, %c0_23, %c0_24] : memref<2x1x96xf32, #tpu.memory_space<vmem>>, vector<1x1x96xf32>
    %39 = vector.shape_cast %38 : vector<1x1x96xf32> to vector<1x96xf32>
    %40 = vector.broadcast %39 : vector<1x96xf32> to vector<34x96xf32>
    %41 = arith.addf %37, %40 : vector<34x96xf32>
    %c0_25 = arith.constant 0 : index
    %c0_26 = arith.constant 0 : index
    %c0_27 = arith.constant 0 : index
    %42 = vector.load %arg8[%c0_25, %c0_26, %c0_27] : memref<2x32x32xbf16, #tpu.memory_space<vmem>>, vector<1x32x32xbf16>
    %43 = vector.shape_cast %42 : vector<1x32x32xbf16> to vector<32x32xbf16>
    %44 = vector.extract_strided_slice %41 {offsets = [0, 0], sizes = [34, 16], strides = [1, 1]} : vector<34x96xf32> to vector<34x16xf32>
    %45 = arith.truncf %44 : vector<34x16xf32> to vector<34x16xbf16>
    %46 = vector.extract_strided_slice %41 {offsets = [0, 32], sizes = [34, 16], strides = [1, 1]} : vector<34x96xf32> to vector<34x16xf32>
    %47 = arith.truncf %46 : vector<34x16xf32> to vector<34x16xbf16>
    %48 = vector.extract_strided_slice %41 {offsets = [0, 64], sizes = [34, 16], strides = [1, 1]} : vector<34x96xf32> to vector<34x16xf32>
    %49 = arith.truncf %48 : vector<34x16xf32> to vector<34x16xbf16>
    %cst_28 = arith.constant dense<0.000000e+00> : vector<34x34xf32>
    %50 = tpu.matmul %45, %47, %cst_28 {dimension_numbers = #tpu.dot_dimension_numbers<[1], [1], [0], [0], [0, 0, 1, 0], [], []>} : vector<34x16xbf16>, vector<34x16xbf16>, vector<34x34xf32> -> vector<34x34xf32>
    %cst_29 = arith.constant 2.500000e-01 : f32
    %51 = vector.broadcast %cst_29 : f32 to vector<34x34xf32>
    %52 = arith.mulf %50, %51 : vector<34x34xf32>
    %53 = arith.addf %52, %5 : vector<34x34xf32>
    %cst_30 = arith.constant dense<0xFF800000> : vector<34xf32>
    %54 = vector.multi_reduction <maximumf>, %53, %cst_30 [1] : vector<34x34xf32> to vector<34xf32>
    %55 = vector.shape_cast %54 : vector<34xf32> to vector<34x1xf32>
    %56 = vector.broadcast %55 : vector<34x1xf32> to vector<34x34xf32>
    %57 = arith.subf %53, %56 : vector<34x34xf32>
    %58 = math.exp %57 : vector<34x34xf32>
    %cst_31 = arith.constant dense<0.000000e+00> : vector<34xf32>
    %59 = vector.multi_reduction <add>, %58, %cst_31 [1] : vector<34x34xf32> to vector<34xf32>
    %60 = vector.shape_cast %59 : vector<34xf32> to vector<34x1xf32>
    %61 = tpu.reciprocal %60 {approx = true} : vector<34x1xf32> -> vector<34x1xf32>
    %62 = vector.broadcast %61 : vector<34x1xf32> to vector<34x34xf32>
    %63 = arith.mulf %58, %62 : vector<34x34xf32>
    %64 = arith.truncf %63 : vector<34x34xf32> to vector<34x34xbf16>
    %cst_32 = arith.constant dense<0.000000e+00> : vector<34x16xf32>
    %65 = tpu.matmul %64, %49, %cst_32 {dimension_numbers = #tpu.dot_dimension_numbers<[1], [0], [0], [1], [0, 0, 1, 1], [], []>} : vector<34x34xbf16>, vector<34x16xbf16>, vector<34x16xf32> -> vector<34x16xf32>
    %66 = arith.truncf %65 : vector<34x16xf32> to vector<34x16xbf16>
    %67 = vector.extract_strided_slice %43 {offsets = [0, 0], sizes = [16, 32], strides = [1, 1]} : vector<32x32xbf16> to vector<16x32xbf16>
    %cst_33 = arith.constant dense<0.000000e+00> : vector<34x32xf32>
    %68 = tpu.matmul %66, %67, %cst_33 {dimension_numbers = #tpu.dot_dimension_numbers<[1], [0], [0], [1], [0, 0, 1, 1], [], []>} : vector<34x16xbf16>, vector<16x32xbf16>, vector<34x32xf32> -> vector<34x32xf32>
    %69 = vector.extract_strided_slice %41 {offsets = [0, 16], sizes = [34, 16], strides = [1, 1]} : vector<34x96xf32> to vector<34x16xf32>
    %70 = arith.truncf %69 : vector<34x16xf32> to vector<34x16xbf16>
    %71 = vector.extract_strided_slice %41 {offsets = [0, 48], sizes = [34, 16], strides = [1, 1]} : vector<34x96xf32> to vector<34x16xf32>
    %72 = arith.truncf %71 : vector<34x16xf32> to vector<34x16xbf16>
    %73 = vector.extract_strided_slice %41 {offsets = [0, 80], sizes = [34, 16], strides = [1, 1]} : vector<34x96xf32> to vector<34x16xf32>
    %74 = arith.truncf %73 : vector<34x16xf32> to vector<34x16xbf16>
    %cst_34 = arith.constant dense<0.000000e+00> : vector<34x34xf32>
    %75 = tpu.matmul %70, %72, %cst_34 {dimension_numbers = #tpu.dot_dimension_numbers<[1], [1], [0], [0], [0, 0, 1, 0], [], []>} : vector<34x16xbf16>, vector<34x16xbf16>, vector<34x34xf32> -> vector<34x34xf32>
    %cst_35 = arith.constant 2.500000e-01 : f32
    %76 = vector.broadcast %cst_35 : f32 to vector<34x34xf32>
    %77 = arith.mulf %75, %76 : vector<34x34xf32>
    %78 = arith.addf %77, %5 : vector<34x34xf32>
    %cst_36 = arith.constant dense<0xFF800000> : vector<34xf32>
    %79 = vector.multi_reduction <maximumf>, %78, %cst_36 [1] : vector<34x34xf32> to vector<34xf32>
    %80 = vector.shape_cast %79 : vector<34xf32> to vector<34x1xf32>
    %81 = vector.broadcast %80 : vector<34x1xf32> to vector<34x34xf32>
    %82 = arith.subf %78, %81 : vector<34x34xf32>
    %83 = math.exp %82 : vector<34x34xf32>
    %cst_37 = arith.constant dense<0.000000e+00> : vector<34xf32>
    %84 = vector.multi_reduction <add>, %83, %cst_37 [1] : vector<34x34xf32> to vector<34xf32>
    %85 = vector.shape_cast %84 : vector<34xf32> to vector<34x1xf32>
    %86 = tpu.reciprocal %85 {approx = true} : vector<34x1xf32> -> vector<34x1xf32>
    %87 = vector.broadcast %86 : vector<34x1xf32> to vector<34x34xf32>
    %88 = arith.mulf %83, %87 : vector<34x34xf32>
    %89 = arith.truncf %88 : vector<34x34xf32> to vector<34x34xbf16>
    %cst_38 = arith.constant dense<0.000000e+00> : vector<34x16xf32>
    %90 = tpu.matmul %89, %74, %cst_38 {dimension_numbers = #tpu.dot_dimension_numbers<[1], [0], [0], [1], [0, 0, 1, 1], [], []>} : vector<34x34xbf16>, vector<34x16xbf16>, vector<34x16xf32> -> vector<34x16xf32>
    %91 = arith.truncf %90 : vector<34x16xf32> to vector<34x16xbf16>
    %92 = vector.extract_strided_slice %43 {offsets = [16, 0], sizes = [16, 32], strides = [1, 1]} : vector<32x32xbf16> to vector<16x32xbf16>
    %cst_39 = arith.constant dense<0.000000e+00> : vector<34x32xf32>
    %93 = tpu.matmul %91, %92, %cst_39 {dimension_numbers = #tpu.dot_dimension_numbers<[1], [0], [0], [1], [0, 0, 1, 1], [], []>} : vector<34x16xbf16>, vector<16x32xbf16>, vector<34x32xf32> -> vector<34x32xf32>
    %94 = arith.addf %68, %93 : vector<34x32xf32>
    %95 = arith.addf %4, %94 : vector<34x32xf32>
    %c0_40 = arith.constant 0 : index
    %c0_41 = arith.constant 0 : index
    %c0_42 = arith.constant 0 : index
    %96 = vector.load %arg9[%c0_40, %c0_41, %c0_42] : memref<2x1x32xf32, #tpu.memory_space<vmem>>, vector<1x1x32xf32>
    %97 = vector.shape_cast %96 : vector<1x1x32xf32> to vector<1x32xf32>
    %98 = vector.broadcast %97 : vector<1x32xf32> to vector<34x32xf32>
    %99 = arith.addf %95, %98 : vector<34x32xf32>
    %c0_43 = arith.constant 0 : index
    %c0_44 = arith.constant 0 : index
    %c0_45 = arith.constant 0 : index
    %100 = vector.load %arg10[%c0_43, %c0_44, %c0_45] : memref<2x1x32xf32, #tpu.memory_space<vmem>>, vector<1x1x32xf32>
    %101 = vector.shape_cast %100 : vector<1x1x32xf32> to vector<1x32xf32>
    %c0_46 = arith.constant 0 : index
    %c0_47 = arith.constant 0 : index
    %c0_48 = arith.constant 0 : index
    %102 = vector.load %arg11[%c0_46, %c0_47, %c0_48] : memref<2x1x32xf32, #tpu.memory_space<vmem>>, vector<1x1x32xf32>
    %103 = vector.shape_cast %102 : vector<1x1x32xf32> to vector<1x32xf32>
    %cst_49 = arith.constant dense<0.000000e+00> : vector<34xf32>
    %104 = vector.multi_reduction <add>, %99, %cst_49 [1] : vector<34x32xf32> to vector<34xf32>
    %105 = vector.shape_cast %104 : vector<34xf32> to vector<34x1xf32>
    %cst_50 = arith.constant 3.200000e+01 : f32
    %106 = vector.broadcast %cst_50 : f32 to vector<34x1xf32>
    %107 = arith.divf %105, %106 : vector<34x1xf32>
    %108 = vector.broadcast %107 : vector<34x1xf32> to vector<34x32xf32>
    %109 = arith.subf %99, %108 : vector<34x32xf32>
    %110 = vector.broadcast %107 : vector<34x1xf32> to vector<34x32xf32>
    %111 = arith.subf %99, %110 : vector<34x32xf32>
    %112 = arith.mulf %109, %111 : vector<34x32xf32>
    %cst_51 = arith.constant dense<0.000000e+00> : vector<34xf32>
    %113 = vector.multi_reduction <add>, %112, %cst_51 [1] : vector<34x32xf32> to vector<34xf32>
    %114 = vector.shape_cast %113 : vector<34xf32> to vector<34x1xf32>
    %cst_52 = arith.constant 3.200000e+01 : f32
    %115 = vector.broadcast %cst_52 : f32 to vector<34x1xf32>
    %116 = arith.divf %114, %115 : vector<34x1xf32>
    %117 = vector.broadcast %107 : vector<34x1xf32> to vector<34x32xf32>
    %118 = arith.subf %99, %117 : vector<34x32xf32>
    %cst_53 = arith.constant 9.99999974E-6 : f32
    %119 = vector.broadcast %cst_53 : f32 to vector<34x1xf32>
    %120 = arith.addf %116, %119 : vector<34x1xf32>
    %121 = math.rsqrt %120 : vector<34x1xf32>
    %122 = vector.broadcast %121 : vector<34x1xf32> to vector<34x32xf32>
    %123 = arith.mulf %118, %122 : vector<34x32xf32>
    %124 = vector.broadcast %101 : vector<1x32xf32> to vector<34x32xf32>
    %125 = arith.mulf %123, %124 : vector<34x32xf32>
    %126 = vector.broadcast %103 : vector<1x32xf32> to vector<34x32xf32>
    %127 = arith.addf %125, %126 : vector<34x32xf32>
    %128 = arith.truncf %127 : vector<34x32xf32> to vector<34x32xbf16>
    %c0_54 = arith.constant 0 : index
    %c0_55 = arith.constant 0 : index
    %c0_56 = arith.constant 0 : index
    %129 = vector.load %arg12[%c0_54, %c0_55, %c0_56] : memref<2x32x128xbf16, #tpu.memory_space<vmem>>, vector<1x32x128xbf16>
    %130 = vector.shape_cast %129 : vector<1x32x128xbf16> to vector<32x128xbf16>
    %cst_57 = arith.constant dense<0.000000e+00> : vector<34x128xf32>
    %131 = tpu.matmul %128, %130, %cst_57 {dimension_numbers = #tpu.dot_dimension_numbers<[1], [0], [0], [1], [0, 0, 1, 1], [], []>} : vector<34x32xbf16>, vector<32x128xbf16>, vector<34x128xf32> -> vector<34x128xf32>
    %c0_58 = arith.constant 0 : index
    %c0_59 = arith.constant 0 : index
    %c0_60 = arith.constant 0 : index
    %132 = vector.load %arg13[%c0_58, %c0_59, %c0_60] : memref<2x1x128xf32, #tpu.memory_space<vmem>>, vector<1x1x128xf32>
    %133 = vector.shape_cast %132 : vector<1x1x128xf32> to vector<1x128xf32>
    %134 = vector.broadcast %133 : vector<1x128xf32> to vector<34x128xf32>
    %135 = arith.addf %131, %134 : vector<34x128xf32>
    %cst_61 = arith.constant 5.000000e-01 : f32
    %136 = vector.broadcast %cst_61 : f32 to vector<34x128xf32>
    %137 = arith.mulf %136, %135 : vector<34x128xf32>
    %cst_62 = arith.constant 4.471500e-02 : f32
    %138 = vector.broadcast %cst_62 : f32 to vector<34x128xf32>
    %139 = arith.mulf %138, %135 : vector<34x128xf32>
    %140 = arith.mulf %139, %135 : vector<34x128xf32>
    %141 = arith.mulf %140, %135 : vector<34x128xf32>
    %142 = arith.addf %135, %141 : vector<34x128xf32>
    %cst_63 = arith.constant 0.797884583 : f32
    %143 = vector.broadcast %cst_63 : f32 to vector<34x128xf32>
    %144 = arith.mulf %143, %142 : vector<34x128xf32>
    %145 = math.tanh %144 : vector<34x128xf32>
    %cst_64 = arith.constant 1.000000e+00 : f32
    %146 = vector.broadcast %cst_64 : f32 to vector<34x128xf32>
    %147 = arith.addf %146, %145 : vector<34x128xf32>
    %148 = arith.mulf %137, %147 : vector<34x128xf32>
    %149 = arith.truncf %148 : vector<34x128xf32> to vector<34x128xbf16>
    %c0_65 = arith.constant 0 : index
    %c0_66 = arith.constant 0 : index
    %c0_67 = arith.constant 0 : index
    %150 = vector.load %arg14[%c0_65, %c0_66, %c0_67] : memref<2x128x32xbf16, #tpu.memory_space<vmem>>, vector<1x128x32xbf16>
    %151 = vector.shape_cast %150 : vector<1x128x32xbf16> to vector<128x32xbf16>
    %cst_68 = arith.constant dense<0.000000e+00> : vector<34x32xf32>
    %152 = tpu.matmul %149, %151, %cst_68 {dimension_numbers = #tpu.dot_dimension_numbers<[1], [0], [0], [1], [0, 0, 1, 1], [], []>} : vector<34x128xbf16>, vector<128x32xbf16>, vector<34x32xf32> -> vector<34x32xf32>
    %c0_69 = arith.constant 0 : index
    %c0_70 = arith.constant 0 : index
    %c0_71 = arith.constant 0 : index
    %153 = vector.load %arg15[%c0_69, %c0_70, %c0_71] : memref<2x1x32xf32, #tpu.memory_space<vmem>>, vector<1x1x32xf32>
    %154 = vector.shape_cast %153 : vector<1x1x32xf32> to vector<1x32xf32>
    %155 = vector.broadcast %154 : vector<1x32xf32> to vector<34x32xf32>
    %156 = arith.addf %152, %155 : vector<34x32xf32>
    %157 = arith.addf %99, %156 : vector<34x32xf32>
    %c1 = arith.constant 1 : index
    %c0_72 = arith.constant 0 : index
    %c0_73 = arith.constant 0 : index
    %158 = vector.load %arg4[%c1, %c0_72, %c0_73] : memref<2x1x32xf32, #tpu.memory_space<vmem>>, vector<1x1x32xf32>
    %159 = vector.shape_cast %158 : vector<1x1x32xf32> to vector<1x32xf32>
    %c1_74 = arith.constant 1 : index
    %c0_75 = arith.constant 0 : index
    %c0_76 = arith.constant 0 : index
    %160 = vector.load %arg5[%c1_74, %c0_75, %c0_76] : memref<2x1x32xf32, #tpu.memory_space<vmem>>, vector<1x1x32xf32>
    %161 = vector.shape_cast %160 : vector<1x1x32xf32> to vector<1x32xf32>
    %cst_77 = arith.constant dense<0.000000e+00> : vector<34xf32>
    %162 = vector.multi_reduction <add>, %157, %cst_77 [1] : vector<34x32xf32> to vector<34xf32>
    %163 = vector.shape_cast %162 : vector<34xf32> to vector<34x1xf32>
    %cst_78 = arith.constant 3.200000e+01 : f32
    %164 = vector.broadcast %cst_78 : f32 to vector<34x1xf32>
    %165 = arith.divf %163, %164 : vector<34x1xf32>
    %166 = vector.broadcast %165 : vector<34x1xf32> to vector<34x32xf32>
    %167 = arith.subf %157, %166 : vector<34x32xf32>
    %168 = vector.broadcast %165 : vector<34x1xf32> to vector<34x32xf32>
    %169 = arith.subf %157, %168 : vector<34x32xf32>
    %170 = arith.mulf %167, %169 : vector<34x32xf32>
    %cst_79 = arith.constant dense<0.000000e+00> : vector<34xf32>
    %171 = vector.multi_reduction <add>, %170, %cst_79 [1] : vector<34x32xf32> to vector<34xf32>
    %172 = vector.shape_cast %171 : vector<34xf32> to vector<34x1xf32>
    %cst_80 = arith.constant 3.200000e+01 : f32
    %173 = vector.broadcast %cst_80 : f32 to vector<34x1xf32>
    %174 = arith.divf %172, %173 : vector<34x1xf32>
    %175 = vector.broadcast %165 : vector<34x1xf32> to vector<34x32xf32>
    %176 = arith.subf %157, %175 : vector<34x32xf32>
    %cst_81 = arith.constant 9.99999974E-6 : f32
    %177 = vector.broadcast %cst_81 : f32 to vector<34x1xf32>
    %178 = arith.addf %174, %177 : vector<34x1xf32>
    %179 = math.rsqrt %178 : vector<34x1xf32>
    %180 = vector.broadcast %179 : vector<34x1xf32> to vector<34x32xf32>
    %181 = arith.mulf %176, %180 : vector<34x32xf32>
    %182 = vector.broadcast %159 : vector<1x32xf32> to vector<34x32xf32>
    %183 = arith.mulf %181, %182 : vector<34x32xf32>
    %184 = vector.broadcast %161 : vector<1x32xf32> to vector<34x32xf32>
    %185 = arith.addf %183, %184 : vector<34x32xf32>
    %186 = arith.truncf %185 : vector<34x32xf32> to vector<34x32xbf16>
    %c1_82 = arith.constant 1 : index
    %c0_83 = arith.constant 0 : index
    %c0_84 = arith.constant 0 : index
    %187 = vector.load %arg6[%c1_82, %c0_83, %c0_84] : memref<2x32x96xbf16, #tpu.memory_space<vmem>>, vector<1x32x96xbf16>
    %188 = vector.shape_cast %187 : vector<1x32x96xbf16> to vector<32x96xbf16>
    %cst_85 = arith.constant dense<0.000000e+00> : vector<34x96xf32>
    %189 = tpu.matmul %186, %188, %cst_85 {dimension_numbers = #tpu.dot_dimension_numbers<[1], [0], [0], [1], [0, 0, 1, 1], [], []>} : vector<34x32xbf16>, vector<32x96xbf16>, vector<34x96xf32> -> vector<34x96xf32>
    %c1_86 = arith.constant 1 : index
    %c0_87 = arith.constant 0 : index
    %c0_88 = arith.constant 0 : index
    %190 = vector.load %arg7[%c1_86, %c0_87, %c0_88] : memref<2x1x96xf32, #tpu.memory_space<vmem>>, vector<1x1x96xf32>
    %191 = vector.shape_cast %190 : vector<1x1x96xf32> to vector<1x96xf32>
    %192 = vector.broadcast %191 : vector<1x96xf32> to vector<34x96xf32>
    %193 = arith.addf %189, %192 : vector<34x96xf32>
    %c1_89 = arith.constant 1 : index
    %c0_90 = arith.constant 0 : index
    %c0_91 = arith.constant 0 : index
    %194 = vector.load %arg8[%c1_89, %c0_90, %c0_91] : memref<2x32x32xbf16, #tpu.memory_space<vmem>>, vector<1x32x32xbf16>
    %195 = vector.shape_cast %194 : vector<1x32x32xbf16> to vector<32x32xbf16>
    %196 = vector.extract_strided_slice %193 {offsets = [0, 0], sizes = [34, 16], strides = [1, 1]} : vector<34x96xf32> to vector<34x16xf32>
    %197 = arith.truncf %196 : vector<34x16xf32> to vector<34x16xbf16>
    %198 = vector.extract_strided_slice %193 {offsets = [0, 32], sizes = [34, 16], strides = [1, 1]} : vector<34x96xf32> to vector<34x16xf32>
    %199 = arith.truncf %198 : vector<34x16xf32> to vector<34x16xbf16>
    %200 = vector.extract_strided_slice %193 {offsets = [0, 64], sizes = [34, 16], strides = [1, 1]} : vector<34x96xf32> to vector<34x16xf32>
    %201 = arith.truncf %200 : vector<34x16xf32> to vector<34x16xbf16>
    %cst_92 = arith.constant dense<0.000000e+00> : vector<34x34xf32>
    %202 = tpu.matmul %197, %199, %cst_92 {dimension_numbers = #tpu.dot_dimension_numbers<[1], [1], [0], [0], [0, 0, 1, 0], [], []>} : vector<34x16xbf16>, vector<34x16xbf16>, vector<34x34xf32> -> vector<34x34xf32>
    %cst_93 = arith.constant 2.500000e-01 : f32
    %203 = vector.broadcast %cst_93 : f32 to vector<34x34xf32>
    %204 = arith.mulf %202, %203 : vector<34x34xf32>
    %205 = arith.addf %204, %5 : vector<34x34xf32>
    %cst_94 = arith.constant dense<0xFF800000> : vector<34xf32>
    %206 = vector.multi_reduction <maximumf>, %205, %cst_94 [1] : vector<34x34xf32> to vector<34xf32>
    %207 = vector.shape_cast %206 : vector<34xf32> to vector<34x1xf32>
    %208 = vector.broadcast %207 : vector<34x1xf32> to vector<34x34xf32>
    %209 = arith.subf %205, %208 : vector<34x34xf32>
    %210 = math.exp %209 : vector<34x34xf32>
    %cst_95 = arith.constant dense<0.000000e+00> : vector<34xf32>
    %211 = vector.multi_reduction <add>, %210, %cst_95 [1] : vector<34x34xf32> to vector<34xf32>
    %212 = vector.shape_cast %211 : vector<34xf32> to vector<34x1xf32>
    %213 = tpu.reciprocal %212 {approx = true} : vector<34x1xf32> -> vector<34x1xf32>
    %214 = vector.broadcast %213 : vector<34x1xf32> to vector<34x34xf32>
    %215 = arith.mulf %210, %214 : vector<34x34xf32>
    %216 = arith.truncf %215 : vector<34x34xf32> to vector<34x34xbf16>
    %cst_96 = arith.constant dense<0.000000e+00> : vector<34x16xf32>
    %217 = tpu.matmul %216, %201, %cst_96 {dimension_numbers = #tpu.dot_dimension_numbers<[1], [0], [0], [1], [0, 0, 1, 1], [], []>} : vector<34x34xbf16>, vector<34x16xbf16>, vector<34x16xf32> -> vector<34x16xf32>
    %218 = arith.truncf %217 : vector<34x16xf32> to vector<34x16xbf16>
    %219 = vector.extract_strided_slice %195 {offsets = [0, 0], sizes = [16, 32], strides = [1, 1]} : vector<32x32xbf16> to vector<16x32xbf16>
    %cst_97 = arith.constant dense<0.000000e+00> : vector<34x32xf32>
    %220 = tpu.matmul %218, %219, %cst_97 {dimension_numbers = #tpu.dot_dimension_numbers<[1], [0], [0], [1], [0, 0, 1, 1], [], []>} : vector<34x16xbf16>, vector<16x32xbf16>, vector<34x32xf32> -> vector<34x32xf32>
    %221 = vector.extract_strided_slice %193 {offsets = [0, 16], sizes = [34, 16], strides = [1, 1]} : vector<34x96xf32> to vector<34x16xf32>
    %222 = arith.truncf %221 : vector<34x16xf32> to vector<34x16xbf16>
    %223 = vector.extract_strided_slice %193 {offsets = [0, 48], sizes = [34, 16], strides = [1, 1]} : vector<34x96xf32> to vector<34x16xf32>
    %224 = arith.truncf %223 : vector<34x16xf32> to vector<34x16xbf16>
    %225 = vector.extract_strided_slice %193 {offsets = [0, 80], sizes = [34, 16], strides = [1, 1]} : vector<34x96xf32> to vector<34x16xf32>
    %226 = arith.truncf %225 : vector<34x16xf32> to vector<34x16xbf16>
    %cst_98 = arith.constant dense<0.000000e+00> : vector<34x34xf32>
    %227 = tpu.matmul %222, %224, %cst_98 {dimension_numbers = #tpu.dot_dimension_numbers<[1], [1], [0], [0], [0, 0, 1, 0], [], []>} : vector<34x16xbf16>, vector<34x16xbf16>, vector<34x34xf32> -> vector<34x34xf32>
    %cst_99 = arith.constant 2.500000e-01 : f32
    %228 = vector.broadcast %cst_99 : f32 to vector<34x34xf32>
    %229 = arith.mulf %227, %228 : vector<34x34xf32>
    %230 = arith.addf %229, %5 : vector<34x34xf32>
    %cst_100 = arith.constant dense<0xFF800000> : vector<34xf32>
    %231 = vector.multi_reduction <maximumf>, %230, %cst_100 [1] : vector<34x34xf32> to vector<34xf32>
    %232 = vector.shape_cast %231 : vector<34xf32> to vector<34x1xf32>
    %233 = vector.broadcast %232 : vector<34x1xf32> to vector<34x34xf32>
    %234 = arith.subf %230, %233 : vector<34x34xf32>
    %235 = math.exp %234 : vector<34x34xf32>
    %cst_101 = arith.constant dense<0.000000e+00> : vector<34xf32>
    %236 = vector.multi_reduction <add>, %235, %cst_101 [1] : vector<34x34xf32> to vector<34xf32>
    %237 = vector.shape_cast %236 : vector<34xf32> to vector<34x1xf32>
    %238 = tpu.reciprocal %237 {approx = true} : vector<34x1xf32> -> vector<34x1xf32>
    %239 = vector.broadcast %238 : vector<34x1xf32> to vector<34x34xf32>
    %240 = arith.mulf %235, %239 : vector<34x34xf32>
    %241 = arith.truncf %240 : vector<34x34xf32> to vector<34x34xbf16>
    %cst_102 = arith.constant dense<0.000000e+00> : vector<34x16xf32>
    %242 = tpu.matmul %241, %226, %cst_102 {dimension_numbers = #tpu.dot_dimension_numbers<[1], [0], [0], [1], [0, 0, 1, 1], [], []>} : vector<34x34xbf16>, vector<34x16xbf16>, vector<34x16xf32> -> vector<34x16xf32>
    %243 = arith.truncf %242 : vector<34x16xf32> to vector<34x16xbf16>
    %244 = vector.extract_strided_slice %195 {offsets = [16, 0], sizes = [16, 32], strides = [1, 1]} : vector<32x32xbf16> to vector<16x32xbf16>
    %cst_103 = arith.constant dense<0.000000e+00> : vector<34x32xf32>
    %245 = tpu.matmul %243, %244, %cst_103 {dimension_numbers = #tpu.dot_dimension_numbers<[1], [0], [0], [1], [0, 0, 1, 1], [], []>} : vector<34x16xbf16>, vector<16x32xbf16>, vector<34x32xf32> -> vector<34x32xf32>
    %246 = arith.addf %220, %245 : vector<34x32xf32>
    %247 = arith.addf %157, %246 : vector<34x32xf32>
    %c1_104 = arith.constant 1 : index
    %c0_105 = arith.constant 0 : index
    %c0_106 = arith.constant 0 : index
    %248 = vector.load %arg9[%c1_104, %c0_105, %c0_106] : memref<2x1x32xf32, #tpu.memory_space<vmem>>, vector<1x1x32xf32>
    %249 = vector.shape_cast %248 : vector<1x1x32xf32> to vector<1x32xf32>
    %250 = vector.broadcast %249 : vector<1x32xf32> to vector<34x32xf32>
    %251 = arith.addf %247, %250 : vector<34x32xf32>
    %c1_107 = arith.constant 1 : index
    %c0_108 = arith.constant 0 : index
    %c0_109 = arith.constant 0 : index
    %252 = vector.load %arg10[%c1_107, %c0_108, %c0_109] : memref<2x1x32xf32, #tpu.memory_space<vmem>>, vector<1x1x32xf32>
    %253 = vector.shape_cast %252 : vector<1x1x32xf32> to vector<1x32xf32>
    %c1_110 = arith.constant 1 : index
    %c0_111 = arith.constant 0 : index
    %c0_112 = arith.constant 0 : index
    %254 = vector.load %arg11[%c1_110, %c0_111, %c0_112] : memref<2x1x32xf32, #tpu.memory_space<vmem>>, vector<1x1x32xf32>
    %255 = vector.shape_cast %254 : vector<1x1x32xf32> to vector<1x32xf32>
    %cst_113 = arith.constant dense<0.000000e+00> : vector<34xf32>
    %256 = vector.multi_reduction <add>, %251, %cst_113 [1] : vector<34x32xf32> to vector<34xf32>
    %257 = vector.shape_cast %256 : vector<34xf32> to vector<34x1xf32>
    %cst_114 = arith.constant 3.200000e+01 : f32
    %258 = vector.broadcast %cst_114 : f32 to vector<34x1xf32>
    %259 = arith.divf %257, %258 : vector<34x1xf32>
    %260 = vector.broadcast %259 : vector<34x1xf32> to vector<34x32xf32>
    %261 = arith.subf %251, %260 : vector<34x32xf32>
    %262 = vector.broadcast %259 : vector<34x1xf32> to vector<34x32xf32>
    %263 = arith.subf %251, %262 : vector<34x32xf32>
    %264 = arith.mulf %261, %263 : vector<34x32xf32>
    %cst_115 = arith.constant dense<0.000000e+00> : vector<34xf32>
    %265 = vector.multi_reduction <add>, %264, %cst_115 [1] : vector<34x32xf32> to vector<34xf32>
    %266 = vector.shape_cast %265 : vector<34xf32> to vector<34x1xf32>
    %cst_116 = arith.constant 3.200000e+01 : f32
    %267 = vector.broadcast %cst_116 : f32 to vector<34x1xf32>
    %268 = arith.divf %266, %267 : vector<34x1xf32>
    %269 = vector.broadcast %259 : vector<34x1xf32> to vector<34x32xf32>
    %270 = arith.subf %251, %269 : vector<34x32xf32>
    %cst_117 = arith.constant 9.99999974E-6 : f32
    %271 = vector.broadcast %cst_117 : f32 to vector<34x1xf32>
    %272 = arith.addf %268, %271 : vector<34x1xf32>
    %273 = math.rsqrt %272 : vector<34x1xf32>
    %274 = vector.broadcast %273 : vector<34x1xf32> to vector<34x32xf32>
    %275 = arith.mulf %270, %274 : vector<34x32xf32>
    %276 = vector.broadcast %253 : vector<1x32xf32> to vector<34x32xf32>
    %277 = arith.mulf %275, %276 : vector<34x32xf32>
    %278 = vector.broadcast %255 : vector<1x32xf32> to vector<34x32xf32>
    %279 = arith.addf %277, %278 : vector<34x32xf32>
    %280 = arith.truncf %279 : vector<34x32xf32> to vector<34x32xbf16>
    %c1_118 = arith.constant 1 : index
    %c0_119 = arith.constant 0 : index
    %c0_120 = arith.constant 0 : index
    %281 = vector.load %arg12[%c1_118, %c0_119, %c0_120] : memref<2x32x128xbf16, #tpu.memory_space<vmem>>, vector<1x32x128xbf16>
    %282 = vector.shape_cast %281 : vector<1x32x128xbf16> to vector<32x128xbf16>
    %cst_121 = arith.constant dense<0.000000e+00> : vector<34x128xf32>
    %283 = tpu.matmul %280, %282, %cst_121 {dimension_numbers = #tpu.dot_dimension_numbers<[1], [0], [0], [1], [0, 0, 1, 1], [], []>} : vector<34x32xbf16>, vector<32x128xbf16>, vector<34x128xf32> -> vector<34x128xf32>
    %c1_122 = arith.constant 1 : index
    %c0_123 = arith.constant 0 : index
    %c0_124 = arith.constant 0 : index
    %284 = vector.load %arg13[%c1_122, %c0_123, %c0_124] : memref<2x1x128xf32, #tpu.memory_space<vmem>>, vector<1x1x128xf32>
    %285 = vector.shape_cast %284 : vector<1x1x128xf32> to vector<1x128xf32>
    %286 = vector.broadcast %285 : vector<1x128xf32> to vector<34x128xf32>
    %287 = arith.addf %283, %286 : vector<34x128xf32>
    %cst_125 = arith.constant 5.000000e-01 : f32
    %288 = vector.broadcast %cst_125 : f32 to vector<34x128xf32>
    %289 = arith.mulf %288, %287 : vector<34x128xf32>
    %cst_126 = arith.constant 4.471500e-02 : f32
    %290 = vector.broadcast %cst_126 : f32 to vector<34x128xf32>
    %291 = arith.mulf %290, %287 : vector<34x128xf32>
    %292 = arith.mulf %291, %287 : vector<34x128xf32>
    %293 = arith.mulf %292, %287 : vector<34x128xf32>
    %294 = arith.addf %287, %293 : vector<34x128xf32>
    %cst_127 = arith.constant 0.797884583 : f32
    %295 = vector.broadcast %cst_127 : f32 to vector<34x128xf32>
    %296 = arith.mulf %295, %294 : vector<34x128xf32>
    %297 = math.tanh %296 : vector<34x128xf32>
    %cst_128 = arith.constant 1.000000e+00 : f32
    %298 = vector.broadcast %cst_128 : f32 to vector<34x128xf32>
    %299 = arith.addf %298, %297 : vector<34x128xf32>
    %300 = arith.mulf %289, %299 : vector<34x128xf32>
    %301 = arith.truncf %300 : vector<34x128xf32> to vector<34x128xbf16>
    %c1_129 = arith.constant 1 : index
    %c0_130 = arith.constant 0 : index
    %c0_131 = arith.constant 0 : index
    %302 = vector.load %arg14[%c1_129, %c0_130, %c0_131] : memref<2x128x32xbf16, #tpu.memory_space<vmem>>, vector<1x128x32xbf16>
    %303 = vector.shape_cast %302 : vector<1x128x32xbf16> to vector<128x32xbf16>
    %cst_132 = arith.constant dense<0.000000e+00> : vector<34x32xf32>
    %304 = tpu.matmul %301, %303, %cst_132 {dimension_numbers = #tpu.dot_dimension_numbers<[1], [0], [0], [1], [0, 0, 1, 1], [], []>} : vector<34x128xbf16>, vector<128x32xbf16>, vector<34x32xf32> -> vector<34x32xf32>
    %c1_133 = arith.constant 1 : index
    %c0_134 = arith.constant 0 : index
    %c0_135 = arith.constant 0 : index
    %305 = vector.load %arg15[%c1_133, %c0_134, %c0_135] : memref<2x1x32xf32, #tpu.memory_space<vmem>>, vector<1x1x32xf32>
    %306 = vector.shape_cast %305 : vector<1x1x32xf32> to vector<1x32xf32>
    %307 = vector.broadcast %306 : vector<1x32xf32> to vector<34x32xf32>
    %308 = arith.addf %304, %307 : vector<34x32xf32>
    %309 = arith.addf %251, %308 : vector<34x32xf32>
    %c0_136 = arith.constant 0 : index
    %c0_137 = arith.constant 0 : index
    %310 = vector.load %arg16[%c0_136, %c0_137] : memref<1x32xf32, #tpu.memory_space<vmem>>, vector<1x32xf32>
    %c0_138 = arith.constant 0 : index
    %c0_139 = arith.constant 0 : index
    %311 = vector.load %arg17[%c0_138, %c0_139] : memref<1x32xf32, #tpu.memory_space<vmem>>, vector<1x32xf32>
    %cst_140 = arith.constant dense<0.000000e+00> : vector<34xf32>
    %312 = vector.multi_reduction <add>, %309, %cst_140 [1] : vector<34x32xf32> to vector<34xf32>
    %313 = vector.shape_cast %312 : vector<34xf32> to vector<34x1xf32>
    %cst_141 = arith.constant 3.200000e+01 : f32
    %314 = vector.broadcast %cst_141 : f32 to vector<34x1xf32>
    %315 = arith.divf %313, %314 : vector<34x1xf32>
    %316 = vector.broadcast %315 : vector<34x1xf32> to vector<34x32xf32>
    %317 = arith.subf %309, %316 : vector<34x32xf32>
    %318 = vector.broadcast %315 : vector<34x1xf32> to vector<34x32xf32>
    %319 = arith.subf %309, %318 : vector<34x32xf32>
    %320 = arith.mulf %317, %319 : vector<34x32xf32>
    %cst_142 = arith.constant dense<0.000000e+00> : vector<34xf32>
    %321 = vector.multi_reduction <add>, %320, %cst_142 [1] : vector<34x32xf32> to vector<34xf32>
    %322 = vector.shape_cast %321 : vector<34xf32> to vector<34x1xf32>
    %cst_143 = arith.constant 3.200000e+01 : f32
    %323 = vector.broadcast %cst_143 : f32 to vector<34x1xf32>
    %324 = arith.divf %322, %323 : vector<34x1xf32>
    %325 = vector.broadcast %315 : vector<34x1xf32> to vector<34x32xf32>
    %326 = arith.subf %309, %325 : vector<34x32xf32>
    %cst_144 = arith.constant 9.99999974E-6 : f32
    %327 = vector.broadcast %cst_144 : f32 to vector<34x1xf32>
    %328 = arith.addf %324, %327 : vector<34x1xf32>
    %329 = math.rsqrt %328 : vector<34x1xf32>
    %330 = vector.broadcast %329 : vector<34x1xf32> to vector<34x32xf32>
    %331 = arith.mulf %326, %330 : vector<34x32xf32>
    %332 = vector.broadcast %310 : vector<1x32xf32> to vector<34x32xf32>
    %333 = arith.mulf %331, %332 : vector<34x32xf32>
    %334 = vector.broadcast %311 : vector<1x32xf32> to vector<34x32xf32>
    %335 = arith.addf %333, %334 : vector<34x32xf32>
    %c0_145 = arith.constant 0 : index
    %c0_146 = arith.constant 0 : index
    %336 = vector.load %arg18[%c0_145, %c0_146] : memref<4x32xf32, #tpu.memory_space<vmem>>, vector<4x32xf32>
    %c0_147 = arith.constant 0 : index
    %c0_148 = arith.constant 0 : index
    %337 = vector.load %arg19[%c0_147, %c0_148] : memref<4x1xf32, #tpu.memory_space<vmem>>, vector<4x1xf32>
    %c0_149 = arith.constant 0 : index
    %c0_150 = arith.constant 0 : index
    %338 = vector.load %arg20[%c0_149, %c0_150] : memref<16x256xf32, #tpu.memory_space<vmem>>, vector<16x256xf32>
    %339 = vector.extract_strided_slice %335 {offsets = [1, 0], sizes = [16, 32], strides = [1, 1]} : vector<34x32xf32> to vector<16x32xf32>
    %cst_151 = arith.constant dense<0.000000e+00> : vector<4x16xf32>
    %340 = tpu.matmul %336, %339, %cst_151 {dimension_numbers = #tpu.dot_dimension_numbers<[1], [1], [0], [0], [0, 0, 1, 0], [], []>} : vector<4x32xf32>, vector<16x32xf32>, vector<4x16xf32> -> vector<4x16xf32>
    %341 = vector.broadcast %337 : vector<4x1xf32> to vector<4x16xf32>
    %342 = arith.addf %340, %341 : vector<4x16xf32>
    %cst_152 = arith.constant dense<0.000000e+00> : vector<4x256xf32>
    %343 = tpu.matmul %342, %338, %cst_152 {dimension_numbers = #tpu.dot_dimension_numbers<[1], [0], [0], [1], [0, 0, 1, 1], [], []>} : vector<4x16xf32>, vector<16x256xf32>, vector<4x256xf32> -> vector<4x256xf32>
    %c0_153 = arith.constant 0 : index
    %c0_154 = arith.constant 0 : index
    %c0_155 = arith.constant 0 : index
    %344 = vector.load %arg21[%c0_153, %c0_154, %c0_155] : memref<2x4x256xf32, #tpu.memory_space<vmem>>, vector<1x4x256xf32>
    %345 = vector.shape_cast %344 : vector<1x4x256xf32> to vector<4x256xf32>
    %346 = vector.shape_cast %343 : vector<4x256xf32> to vector<1x4x256xf32>
    tpu.vector_store %arg21[%c0_153, %c0_154, %c0_155], %346 {strides = array<i32>} : memref<2x4x256xf32, #tpu.memory_space<vmem>>, vector<1x4x256xf32>,
    %347 = vector.extract_strided_slice %335 {offsets = [18, 0], sizes = [16, 32], strides = [1, 1]} : vector<34x32xf32> to vector<16x32xf32>
    %cst_156 = arith.constant dense<0.000000e+00> : vector<4x16xf32>
    %348 = tpu.matmul %336, %347, %cst_156 {dimension_numbers = #tpu.dot_dimension_numbers<[1], [1], [0], [0], [0, 0, 1, 0], [], []>} : vector<4x32xf32>, vector<16x32xf32>, vector<4x16xf32> -> vector<4x16xf32>
    %349 = vector.broadcast %337 : vector<4x1xf32> to vector<4x16xf32>
    %350 = arith.addf %348, %349 : vector<4x16xf32>
    %cst_157 = arith.constant dense<0.000000e+00> : vector<4x256xf32>
    %351 = tpu.matmul %350, %338, %cst_157 {dimension_numbers = #tpu.dot_dimension_numbers<[1], [0], [0], [1], [0, 0, 1, 1], [], []>} : vector<4x16xf32>, vector<16x256xf32>, vector<4x256xf32> -> vector<4x256xf32>
    %c1_158 = arith.constant 1 : index
    %c0_159 = arith.constant 0 : index
    %c0_160 = arith.constant 0 : index
    %352 = vector.load %arg21[%c1_158, %c0_159, %c0_160] : memref<2x4x256xf32, #tpu.memory_space<vmem>>, vector<1x4x256xf32>
    %353 = vector.shape_cast %352 : vector<1x4x256xf32> to vector<4x256xf32>
    %354 = vector.shape_cast %351 : vector<4x256xf32> to vector<1x4x256xf32>
    tpu.vector_store %arg21[%c1_158, %c0_159, %c0_160], %354 {strides = array<i32>} : memref<2x4x256xf32, #tpu.memory_space<vmem>>, vector<1x4x256xf32>,
    return
  }
}

</mosaic_0001>

<llo_original>
// kernel: tile.9
$region0: #{tile.9}
  %s0 = inlined_call_operand.vmem [shape: f32[2,17,32], index: 0, kind: input, shape index: {}]
  %s1 = inlined_call_operand.vmem [shape: f32[34,32], index: 1, kind: output, shape index: {}]
  %v2 = vld [vmem:[%s0] sm:$0xff]
  %vm3 = vcmask 261120
  %4 = vst.msk [vmem:[%s1] sm:$0xff] %vm3, %v2
  %s5 = scalar_lea.vmem %s0, 8
  %v6 = vld [vmem:[%s5] sm:$0xff]
  %vm7 = vcmask 261120
  %s8 = scalar_lea.vmem %s1, 8
  %9 = vst.msk [vmem:[%s8] sm:$0xff] %vm7, %v6
  %s10 = scalar_lea.vmem %s0, 16
  %s11 = smov 3
  %v12 = vld [vmem:[%s10] ss:$8 sm:%s11]
  %vm13 = vcmask 261120
  %s14 = scalar_lea.vmem %s1, 16
  %15 = vst.msk [vmem:[%s14] sm:$0x3] %vm13, %v12
  %s16 = scalar_lea.vmem %s0, 25
  %v17 = vld [vmem:[%s16] sm:$0xff]
  %vm18 = vcmask 261120
  %s19 = scalar_lea.vmem %s1, 18
  %20 = vst.msk [vmem:[%s19] sm:$0xff] %vm18, %v17
  %s21 = scalar_lea.vmem %s0, 33
  %v22 = vld [vmem:[%s21] sm:$0xff]
  %vm23 = vcmask 261120
  %s24 = scalar_lea.vmem %s1, 26
  %25 = vst.msk [vmem:[%s24] sm:$0xff] %vm23, %v22

// kernel: segmenter_forward.1
$region0: #{segmenter_forward.1}
  #allocation0 [shape = 'u32[]', space=smem, size = 0x4, offset = 0x4, fixed_abs, tag = 'smem constant byte address 0x4 - core index']
  #allocation1 [shape = 'u32[72,128]{1,0:T(1,128)}', space=vmem, size = 0x9000, scoped, tag = 'internal scratch']
  %s0 = inlined_call_operand.vmem [shape: f32[34,48], index: 0, kind: input, shape index: {}]
  %s1 = inlined_call_operand.vmem [shape: f32[48,32], index: 1, kind: input, shape index: {}]
  %s2 = inlined_call_operand.vmem [shape: f32[34,32], index: 2, kind: input, shape index: {}]
  %s3 = inlined_call_operand.vmem [shape: f32[34,34], index: 3, kind: input, shape index: {}]
  %s4 = inlined_call_operand.vmem [shape: f32[2,1,32], index: 4, kind: input, shape index: {}]
  %s5 = inlined_call_operand.vmem [shape: f32[2,1,32], index: 5, kind: input, shape index: {}]
  %s6 = inlined_call_operand.vmem [shape: bf16[2,32,96], index: 6, kind: input, shape index: {}]
  %s7 = inlined_call_operand.vmem [shape: f32[2,1,96], index: 7, kind: input, shape index: {}]
  %s8 = inlined_call_operand.vmem [shape: bf16[2,32,32], index: 8, kind: input, shape index: {}]
  %s9 = inlined_call_operand.vmem [shape: f32[2,1,32], index: 9, kind: input, shape index: {}]
  %s10 = inlined_call_operand.vmem [shape: f32[2,1,32], index: 10, kind: input, shape index: {}]
  %s11 = inlined_call_operand.vmem [shape: f32[2,1,32], index: 11, kind: input, shape index: {}]
  %s12 = inlined_call_operand.vmem [shape: bf16[2,32,128], index: 12, kind: input, shape index: {}]
  %s13 = inlined_call_operand.vmem [shape: f32[2,1,128], index: 13, kind: input, shape index: {}]
  %s14 = inlined_call_operand.vmem [shape: bf16[2,128,32], index: 14, kind: input, shape index: {}]
  %s15 = inlined_call_operand.vmem [shape: f32[2,1,32], index: 15, kind: input, shape index: {}]
  %s16 = inlined_call_operand.vmem [shape: f32[1,32], index: 16, kind: input, shape index: {}]
  %s17 = inlined_call_operand.vmem [shape: f32[1,32], index: 17, kind: input, shape index: {}]
  %s18 = inlined_call_operand.vmem [shape: f32[4,32], index: 18, kind: input, shape index: {}]
  %s19 = inlined_call_operand.vmem [shape: f32[4,1], index: 19, kind: input, shape index: {}]
  %s20 = inlined_call_operand.vmem [shape: f32[16,256], index: 20, kind: input, shape index: {}]
  %s21 = inlined_call_operand.vmem [shape: f32[2,4,256], index: 21, kind: output, shape index: {}]
  %s22 = sld [smem:[#allocation0]]
  $region94: #{segmenter_forward.1} parent=0
    _
  %s24 = ssub.s32 1, %s22
  %s25 = scalar_select 0, %s24, %s22
  // Predicated region
  $region2: #{segmenter_forward.1} parent=0 // pred_check
    _
  $region3: #{segmenter_forward.1} parent=0 // pred_check_branch
    %27 = sbr.rel (0) target = $region5
  $region4: #{segmenter_forward.1} parent=0 // pred_region
    _
  $region5: #{segmenter_forward.1} parent=0 // pred_fallthru
    _
  // Predicated region
  $region6: #{segmenter_forward.1} parent=0 // pred_check
    _
  $region7: #{segmenter_forward.1} parent=0 // pred_check_branch
    %29 = sbr.rel (0) target = $region9
  $region8: #{segmenter_forward.1} parent=0 // pred_region
    _
  $region9: #{segmenter_forward.1} parent=0 // pred_fallthru
    _
  // Predicated region
  $region10: #{segmenter_forward.1} parent=0 // pred_check
    _
  $region11: #{segmenter_forward.1} parent=0 // pred_check_branch
    %31 = sbr.rel (0) target = $region13
  $region12: #{segmenter_forward.1} parent=0 // pred_region
    _
  $region13: #{segmenter_forward.1} parent=0 // pred_fallthru
    _
  // Predicated region
  $region14: #{segmenter_forward.1} parent=0 // pred_check
    _
  $region15: #{segmenter_forward.1} parent=0 // pred_check_branch
    %33 = sbr.rel (0) target = $region17
  $region16: #{segmenter_forward.1} parent=0 // pred_region
    _
  $region17: #{segmenter_forward.1} parent=0 // pred_fallthru
    _
  // Predicated region
  $region18: #{segmenter_forward.1} parent=0 // pred_check
    _
  $region19: #{segmenter_forward.1} parent=0 // pred_check_branch
    %35 = sbr.rel (0) target = $region21
  $region20: #{segmenter_forward.1} parent=0 // pred_region
    _
  $region21: #{segmenter_forward.1} parent=0 // pred_fallthru
    _
  // Predicated region
  $region22: #{segmenter_forward.1} parent=0 // pred_check
    _
  $region23: #{segmenter_forward.1} parent=0 // pred_check_branch
    %37 = sbr.rel (0) target = $region25
  $region24: #{segmenter_forward.1} parent=0 // pred_region
    _
  $region25: #{segmenter_forward.1} parent=0 // pred_fallthru
    _
  // Predicated region
  $region26: #{segmenter_forward.1} parent=0 // pred_check
    _
  $region27: #{segmenter_forward.1} parent=0 // pred_check_branch
    %39 = sbr.rel (0) target = $region29
  $region28: #{segmenter_forward.1} parent=0 // pred_region
    _
  $region29: #{segmenter_forward.1} parent=0 // pred_fallthru
    _
  // Predicated region
  $region30: #{segmenter_forward.1} parent=0 // pred_check
    _
  $region31: #{segmenter_forward.1} parent=0 // pred_check_branch
    %41 = sbr.rel (0) target = $region33
  $region32: #{segmenter_forward.1} parent=0 // pred_region
    _
  $region33: #{segmenter_forward.1} parent=0 // pred_fallthru
    _
  // Predicated region
  $region34: #{segmenter_forward.1} parent=0 // pred_check
    _
  $region35: #{segmenter_forward.1} parent=0 // pred_check_branch
    %43 = sbr.rel (0) target = $region37
  $region36: #{segmenter_forward.1} parent=0 // pred_region
    _
  $region37: #{segmenter_forward.1} parent=0 // pred_fallthru
    _
  // Predicated region
  $region38: #{segmenter_forward.1} parent=0 // pred_check
    _
  $region39: #{segmenter_forward.1} parent=0 // pred_check_branch
    %45 = sbr.rel (0) target = $region41
  $region40: #{segmenter_forward.1} parent=0 // pred_region
    _
  $region41: #{segmenter_forward.1} parent=0 // pred_fallthru
    _
  // Predicated region
  $region42: #{segmenter_forward.1} parent=0 // pred_check
    _
  $region43: #{segmenter_forward.1} parent=0 // pred_check_branch
    %47 = sbr.rel (0) target = $region45
  $region44: #{segmenter_forward.1} parent=0 // pred_region
    _
  $region45: #{segmenter_forward.1} parent=0 // pred_fallthru
    _
  // Predicated region
  $region46: #{segmenter_forward.1} parent=0 // pred_check
    _
  $region47: #{segmenter_forward.1} parent=0 // pred_check_branch
    %49 = sbr.rel (0) target = $region49
  $region48: #{segmenter_forward.1} parent=0 // pred_region
    _
  $region49: #{segmenter_forward.1} parent=0 // pred_fallthru
    _
  // Predicated region
  $region50: #{segmenter_forward.1} parent=0 // pred_check
    _
  $region51: #{segmenter_forward.1} parent=0 // pred_check_branch
    %51 = sbr.rel (0) target = $region53
  $region52: #{segmenter_forward.1} parent=0 // pred_region
    _
  $region53: #{segmenter_forward.1} parent=0 // pred_fallthru
    _
  // Predicated region
  $region54: #{segmenter_forward.1} parent=0 // pred_check
    _
  $region55: #{segmenter_forward.1} parent=0 // pred_check_branch
    %53 = sbr.rel (0) target = $region57
  $region56: #{segmenter_forward.1} parent=0 // pred_region
    _
  $region57: #{segmenter_forward.1} parent=0 // pred_fallthru
    _
  // Predicated region
  $region58: #{segmenter_forward.1} parent=0 // pred_check
    _
  $region59: #{segmenter_forward.1} parent=0 // pred_check_branch
    %55 = sbr.rel (0) target = $region61
  $region60: #{segmenter_forward.1} parent=0 // pred_region
    _
  $region61: #{segmenter_forward.1} parent=0 // pred_fallthru
    _
  // Predicated region
  $region62: #{segmenter_forward.1} parent=0 // pred_check
    _
  $region63: #{segmenter_forward.1} parent=0 // pred_check_branch
    %57 = sbr.rel (0) target = $region65
  $region64: #{segmenter_forward.1} parent=0 // pred_region
    _
  $region65: #{segmenter_forward.1} parent=0 // pred_fallthru
    _
  // Predicated region
  $region66: #{segmenter_forward.1} parent=0 // pred_check
    _
  $region67: #{segmenter_forward.1} parent=0 // pred_check_branch
    %59 = sbr.rel (0) target = $region69
  $region68: #{segmenter_forward.1} parent=0 // pred_region
    _
  $region69: #{segmenter_forward.1} parent=0 // pred_fallthru
    _
  // Predicated region
  $region70: #{segmenter_forward.1} parent=0 // pred_check
    _
  $region71: #{segmenter_forward.1} parent=0 // pred_check_branch
    %61 = sbr.rel (0) target = $region73
  $region72: #{segmenter_forward.1} parent=0 // pred_region
    _
  $region73: #{segmenter_forward.1} parent=0 // pred_fallthru
    _
  // Predicated region
  $region74: #{segmenter_forward.1} parent=0 // pred_check
    _
  $region75: #{segmenter_forward.1} parent=0 // pred_check_branch
    %63 = sbr.rel (0) target = $region77
  $region76: #{segmenter_forward.1} parent=0 // pred_region
    _
  $region77: #{segmenter_forward.1} parent=0 // pred_fallthru
    _
  // Predicated region
  $region78: #{segmenter_forward.1} parent=0 // pred_check
    _
  $region79: #{segmenter_forward.1} parent=0 // pred_check_branch
    %65 = sbr.rel (0) target = $region81
  $region80: #{segmenter_forward.1} parent=0 // pred_region
    _
  $region81: #{segmenter_forward.1} parent=0 // pred_fallthru
    _
  // Predicated region
  $region82: #{segmenter_forward.1} parent=0 // pred_check
    _
  $region83: #{segmenter_forward.1} parent=0 // pred_check_branch
    %67 = sbr.rel (0) target = $region85
  $region84: #{segmenter_forward.1} parent=0 // pred_region
    _
  $region85: #{segmenter_forward.1} parent=0 // pred_fallthru
    _
  %v69 = vld [vmem:[%s0] sm:$0xff]
  %v70 = vld [vmem:[%s0 + $0x8] sm:$0xff]
  %v71 = vld [vmem:[%s0 + $0x10] sm:$0xff]
  %v72 = vld [vmem:[%s0 + $0x18] sm:$0xff]
  %v73 = vld [vmem:[%s0 + $0x20] sm:$0x3]
  %v74 = vld [vmem:[%s1] sm:$0xff]
  %v75 = vld [vmem:[%s1 + $0x8] sm:$0xff]
  %v76 = vld [vmem:[%s1 + $0x10] sm:$0xff]
  %v77 = vld [vmem:[%s1 + $0x18] sm:$0xff]
  %v78 = vld [vmem:[%s1 + $0x20] sm:$0xff]
  %v79 = vld [vmem:[%s1 + $0x28] sm:$0xff]
  %v80 = vld [vmem:[%s2] sm:$0xff]
  %v81 = vld [vmem:[%s2 + $0x8] sm:$0xff]
  %v82 = vld [vmem:[%s2 + $0x10] sm:$0xff]
  %v83 = vld [vmem:[%s2 + $0x18] sm:$0xff]
  %v84 = vld [vmem:[%s2 + $0x20] sm:$0x3]
  %vm85 = vcmask 392192
  %v87 = vsel %vm85, %v69, 0
  %v90 = vsel %vm85, %v70, 0
  %v93 = vsel %vm85, %v71, 0
  %v96 = vsel %vm85, %v72, 0
  %v99 = vsel %vm85, %v73, 0
  %101 = vmatpush.msra.mxu0 0.0
  %102 = vmatpush.msra.mxu0 0.0
  %103 = vmatpush.msra.mxu0 0.0
  %104 = vmatpush.msra.mxu0 0.0
  %105 = vmatpush.msra.mxu0 0.0
  %106 = vmatpush.msra.mxu0 0.0
  %107 = vmatpush.msra.mxu0 0.0
  %108 = vmatpush.msra.mxu0 0.0
  %109 = vmatpush.msra.mxu0 0.0
  %110 = vmatpush.msra.mxu0 0.0
  %111 = vmatpush.msra.mxu0 %v79
  %112 = vmatpush.msra.mxu0 %v78
  %113 = vmatpush.msra.mxu0 %v77
  %114 = vmatpush.msra.mxu0 %v76
  %115 = vmatpush.msra.mxu0 %v75
  %116 = vmatpush.msra.mxu0 %v74
  %117 = vmatmul.f32.gmra.mxu0 %v87
  %v118 = vpop.f32.mrf.mxu0
  %v119 = vadd.f32 %v80, %v118
  %120 = vmatmul.f32.gmra.mxu0 %v90
  %v121 = vpop.f32.mrf.mxu0
  %v122 = vadd.f32 %v81, %v121
  %123 = vmatmul.f32.gmra.mxu0 %v93
  %v124 = vpop.f32.mrf.mxu0
  %v125 = vadd.f32 %v82, %v124
  %126 = vmatmul.f32.gmra.mxu0 %v96
  %v127 = vpop.f32.mrf.mxu0
  %v128 = vadd.f32 %v83, %v127
  %129 = vmatmul.f32.gmra.mxu0 %v99
  %v130 = vpop.f32.mrf.mxu0
  %v131 = vadd.f32 %v84, %v130
  %132 = vdwg.mxu0
  %v133 = vld [vmem:[%s3] sm:$0xff]
  %v134 = vld [vmem:[%s3 + $0x8] sm:$0xff]
  %v135 = vld [vmem:[%s3 + $0x10] sm:$0xff]
  %v136 = vld [vmem:[%s3 + $0x18] sm:$0xff]
  %v137 = vld [vmem:[%s3 + $0x20] sm:$0x3]
  %v138 = vld [vmem:[%s4] sm:$0x1]
  %v139 = vld [vmem:[%s5] sm:$0x1]
  %vm140 = vcmask 261120
  %v141 = vsel %vm140, %v119, 0.0
  %142 = vadd.xlane.f32.xlu0 %v141
  %v143 = vpop.xlane.xlu0 %142
  %v144 = vsel %vm140, %v122, 0.0
  %145 = vadd.xlane.f32.xlu0 %v144
  %v146 = vpop.xlane.xlu0 %145
  %v147 = vsel %vm140, %v125, 0.0
  %148 = vadd.xlane.f32.xlu0 %v147
  %v149 = vpop.xlane.xlu0 %148
  %v150 = vsel %vm140, %v128, 0.0
  %151 = vadd.xlane.f32.xlu0 %v150
  %v152 = vpop.xlane.xlu0 %151
  %vm153 = vcmask 254976
  %v154 = vsel %vm153, %v131, 0.0
  %155 = vadd.xlane.f32.xlu0 %v154
  %v156 = vpop.xlane.xlu0 %155
  %v157 = vrcp.pop 32.0
  %v158 = vmul.f32 32.0, %v157
  %v159 = vsub.f32 1.0, %v158
  %v160 = vmul.f32 %v157, %v159
  %v161 = vadd.f32 %v157, %v160
  %vm162 = vweird.f32 %v157
  %v163 = vsel %vm162, %v157, %v161
  %v164 = vmul.f32 %v143, %v163
  %v165 = vmul.f32 %v146, %v163
  %v166 = vmul.f32 %v149, %v163
  %v167 = vmul.f32 %v152, %v163
  %v168 = vmul.f32 %v156, %v163
  %v169 = vsub.f32 %v119, %v164
  %v170 = vsub.f32 %v122, %v165
  %v171 = vsub.f32 %v125, %v166
  %v172 = vsub.f32 %v128, %v167
  %v173 = vsub.f32 %v131, %v168
  %v174 = vmul.f32 %v169, %v169
  %v175 = vmul.f32 %v170, %v170
  %v176 = vmul.f32 %v171, %v171
  %v177 = vmul.f32 %v172, %v172
  %v178 = vmul.f32 %v173, %v173
  %v179 = vsel %vm140, %v174, 0.0
  %180 = vadd.xlane.f32.xlu0 %v179
  %v181 = vpop.xlane.xlu0 %180
  %v182 = vsel %vm140, %v175, 0.0
  %183 = vadd.xlane.f32.xlu0 %v182
  %v184 = vpop.xlane.xlu0 %183
  %v185 = vsel %vm140, %v176, 0.0
  %186 = vadd.xlane.f32.xlu0 %v185
  %v187 = vpop.xlane.xlu0 %186
  %v188 = vsel %vm140, %v177, 0.0
  %189 = vadd.xlane.f32.xlu0 %v188
  %v190 = vpop.xlane.xlu0 %189
  %v191 = vsel %vm153, %v178, 0.0
  %192 = vadd.xlane.f32.xlu0 %v191
  %v193 = vpop.xlane.xlu0 %192
  %v194 = vmul.f32 %v181, %v163
  %v195 = vmul.f32 %v184, %v163
  %v196 = vmul.f32 %v187, %v163
  %v197 = vmul.f32 %v190, %v163
  %v198 = vmul.f32 %v193, %v163
  %v199 = vadd.f32 %v194, 1e-05
  %v200 = vadd.f32 %v195, 1e-05
  %v201 = vadd.f32 %v196, 1e-05
  %v202 = vadd.f32 %v197, 1e-05
  %v203 = vadd.f32 %v198, 1e-05
  %v204 = vrsqrt.pop %v199
  %v205 = vmul.f32 %v204, %v199
  %v206 = vmul.f32 %v205, %v204
  %v207 = vmul.f32 0.5, %v206
  %v208 = vsub.f32 1.5, %v207
  %v209 = vmul.f32 %v204, %v208
  %vm210 = vweird.f32 %v199
  %vm211 = vweird.f32 %v204
  %vm212 = vmor %vm210, %vm211
  %v213 = vsel %vm212, %v204, %v209
  %v214 = vrsqrt.pop %v200
  %v215 = vmul.f32 %v214, %v200
  %v216 = vmul.f32 %v215, %v214
  %v217 = vmul.f32 0.5, %v216
  %v218 = vsub.f32 1.5, %v217
  %v219 = vmul.f32 %v214, %v218
  %vm220 = vweird.f32 %v200
  %vm221 = vweird.f32 %v214
  %vm222 = vmor %vm220, %vm221
  %v223 = vsel %vm222, %v214, %v219
  %v224 = vrsqrt.pop %v201
  %v225 = vmul.f32 %v224, %v201
  %v226 = vmul.f32 %v225, %v224
  %v227 = vmul.f32 0.5, %v226
  %v228 = vsub.f32 1.5, %v227
  %v229 = vmul.f32 %v224, %v228
  %vm230 = vweird.f32 %v201
  %vm231 = vweird.f32 %v224
  %vm232 = vmor %vm230, %vm231
  %v233 = vsel %vm232, %v224, %v229
  %v234 = vrsqrt.pop %v202
  %v235 = vmul.f32 %v234, %v202
  %v236 = vmul.f32 %v235, %v234
  %v237 = vmul.f32 0.5, %v236
  %v238 = vsub.f32 1.5, %v237
  %v239 = vmul.f32 %v234, %v238
  %vm240 = vweird.f32 %v202
  %vm241 = vweird.f32 %v234
  %vm242 = vmor %vm240, %vm241
  %v243 = vsel %vm242, %v234, %v239
  %v244 = vrsqrt.pop %v203
  %v245 = vmul.f32 %v244, %v203
  %v246 = vmul.f32 %v245, %v244
  %v247 = vmul.f32 0.5, %v246
  %v248 = vsub.f32 1.5, %v247
  %v249 = vmul.f32 %v244, %v248
  %vm250 = vweird.f32 %v203
  %vm251 = vweird.f32 %v244
  %vm252 = vmor %vm250, %vm251
  %v253 = vsel %vm252, %v244, %v249
  %v254 = vmul.f32 %v169, %v213
  %v255 = vmul.f32 %v170, %v223
  %v256 = vmul.f32 %v171, %v233
  %v257 = vmul.f32 %v172, %v243
  %v258 = vmul.f32 %v173, %v253
  %v260 = vperm.slane %v138, 0
  %v262 = vmul.f32 %v254, %v260
  %v263 = vmul.f32 %v255, %v260
  %v264 = vmul.f32 %v256, %v260
  %v265 = vmul.f32 %v257, %v260
  %v266 = vmul.f32 %v258, %v260
  %v268 = vperm.slane %v139, 0
  %v270 = vadd.f32 %v262, %v268
  %v271 = vadd.f32 %v263, %v268
  %v272 = vadd.f32 %v264, %v268
  %v273 = vadd.f32 %v265, %v268
  %v274 = vadd.f32 %v266, %v268
  %v275 = vpack.c.bf16 %v271, %v270
  %v276 = vpack.c.bf16 %v273, %v272
  %v277 = vpack.c.bf16 %v274, %v274
  %v278 = vld [vmem:[%s6] sm:$0xf]
  %v279 = vld [vmem:[%s6 + $0x4] sm:$0xf]
  %v280 = vld [vmem:[%s6 + $0x8] sm:$0xf]
  %v281 = vld [vmem:[%s6 + $0xc] sm:$0xf]
  %v282 = vld [vmem:[%s7] sm:$0x1]
  %v284 = vperm.slane %v282, 0
  %v290 = vunpack.c.l.b16 %v278
  %v291 = vunpack.c.l.b16 %v279
  %v292 = vunpack.c.l.b16 %v280
  %v293 = vunpack.c.l.b16 %v281
  %v294 = vpack.c.b16 %v291, %v290
  %v295 = vpack.c.b16 %v293, %v292
  %v299 = vsel %vm140, %v275, 0
  %v302 = vsel %vm140, %v276, 0
  %v305 = vsel %vm140, %v277, 0
  %307 = vmatpush.bf16.msra.mxu0 0
  %308 = vmatpush.bf16.msra.mxu0 0
  %309 = vmatpush.bf16.msra.mxu0 0
  %310 = vmatpush.bf16.msra.mxu0 0
  %311 = vmatpush.bf16.msra.mxu0 0
  %312 = vmatpush.bf16.msra.mxu0 0
  %313 = vmatpush.bf16.msra.mxu0 %v295
  %314 = vmatpush.bf16.msra.mxu0 %v294
  %315 = vmatmul.bf16.gmra.mxu0 %v299
  %v316 = vpop.f32.mrf.mxu0
  %v317 = vadd.f32 %v284, %v316
  %v318 = vpop.f32.mrf.mxu0
  %v319 = vadd.f32 %v284, %v318
  %320 = vmatmul.bf16.gmra.mxu0 %v302
  %v321 = vpop.f32.mrf.mxu0
  %v322 = vadd.f32 %v284, %v321
  %v323 = vpop.f32.mrf.mxu0
  %v324 = vadd.f32 %v284, %v323
  %325 = vmatmul.bf16.gmra.mxu0 %v305
  %v326 = vpop.f32.mrf.mxu0
  %v327 = vadd.f32 %v284, %v326
  %v328 = vpop.f32.mrf.mxu0
  %329 = vdwg.mxu0
  %v330 = vld [vmem:[%s8] sm:$0xf]
  %v331 = vld [vmem:[%s8 + $0x4] sm:$0xf]
  %v332 = vld [vmem:[%s8 + $0x8] sm:$0xf]
  %v333 = vld [vmem:[%s8 + $0xc] sm:$0xf]
  %v334 = vpack.c.bf16 %v319, %v317
  %v335 = vpack.c.bf16 %v324, %v322
  %v336 = vpack.c.bf16 %v327, %v327
  %340 = vrot.lane.b32.xlu0 %v334, 96
  %v341 = vpop.permute.xlu0 %340
  %342 = vrot.lane.b32.xlu0 %v335, 96
  %v343 = vpop.permute.xlu0 %342
  %344 = vrot.lane.b32.xlu0 %v336, 96
  %v345 = vpop.permute.xlu0 %344
  %vm346 = vcmask 130048
  %v348 = vsel %vm346, %v334, 0
  %v351 = vsel %vm346, %v335, 0
  %v354 = vsel %vm346, %v336, 0
  %v357 = vsel %vm346, %v341, 0
  %v360 = vsel %vm346, %v343, 0
  %v363 = vsel %vm346, %v345, 0
  %365 = vmatpush.bf16.xpose.msra.mxu0 0
  %366 = vmatpush.bf16.xpose.msra.mxu0 0
  %367 = vmatpush.bf16.xpose.msra.mxu0 0
  %368 = vmatpush.bf16.xpose.msra.mxu0 0
  %369 = vmatpush.bf16.xpose.msra.mxu0 0
  %370 = vmatpush.bf16.xpose.msra.mxu0 %v363
  %371 = vmatpush.bf16.xpose.msra.mxu0 %v360
  %372 = vmatpush.bf16.xpose.msra.mxu0 %v357
  %373 = vmatmul.bf16.gmra.mxu0 %v348
  %v374 = vpop.f32.mrf.mxu0
  %v375 = vadd.f32 0.0, %v374
  %v376 = vpop.f32.mrf.mxu0
  %v377 = vadd.f32 0.0, %v376
  %378 = vmatmul.bf16.gmra.mxu0 %v351
  %v379 = vpop.f32.mrf.mxu0
  %v380 = vadd.f32 0.0, %v379
  %v381 = vpop.f32.mrf.mxu0
  %v382 = vadd.f32 0.0, %v381
  %383 = vmatmul.bf16.gmra.mxu0 %v354
  %v384 = vpop.f32.mrf.mxu0
  %v385 = vadd.f32 0.0, %v384
  %v386 = vpop.f32.mrf.mxu0
  %387 = vdwg.mxu0
  %v388 = vmul.f32 %v375, 0.25
  %v389 = vmul.f32 %v377, 0.25
  %v390 = vmul.f32 %v380, 0.25
  %v391 = vmul.f32 %v382, 0.25
  %v392 = vmul.f32 %v385, 0.25
  %v393 = vadd.f32 %v388, %v133
  %v394 = vadd.f32 %v389, %v134
  %v395 = vadd.f32 %v390, %v135
  %v396 = vadd.f32 %v391, %v136
  %v397 = vadd.f32 %v392, %v137
  %vm398 = vcmask 277504
  %v399 = vsel %vm398, %v393, -inf
  %400 = vmax.xlane.f32.xlu0 %v399
  %v401 = vpop.xlane.xlu0 %400
  %v402 = vsel %vm398, %v394, -inf
  %403 = vmax.xlane.f32.xlu0 %v402
  %v404 = vpop.xlane.xlu0 %403
  %v405 = vsel %vm398, %v395, -inf
  %406 = vmax.xlane.f32.xlu0 %v405
  %v407 = vpop.xlane.xlu0 %406
  %v408 = vsel %vm398, %v396, -inf
  %409 = vmax.xlane.f32.xlu0 %v408
  %v410 = vpop.xlane.xlu0 %409
  %vm411 = vcmask 271360
  %v412 = vsel %vm411, %v397, -inf
  %413 = vmax.xlane.f32.xlu0 %v412
  %v414 = vpop.xlane.xlu0 %413
  %v415 = vsub.f32 %v393, %v401
  %v416 = vsub.f32 %v394, %v404
  %v417 = vsub.f32 %v395, %v407
  %v418 = vsub.f32 %v396, %v410
  %v419 = vsub.f32 %v397, %v414
  %v420 = vmul.f32 %v415, 1.442695
  %v421 = vpow.pop %v420
  %v422 = vmul.f32 %v416, 1.442695
  %v423 = vpow.pop %v422
  %v424 = vmul.f32 %v417, 1.442695
  %v425 = vpow.pop %v424
  %v426 = vmul.f32 %v418, 1.442695
  %v427 = vpow.pop %v426
  %v428 = vmul.f32 %v419, 1.442695
  %v429 = vpow.pop %v428
  %v430 = vsel %vm398, %v421, 0.0
  %431 = vadd.xlane.f32.xlu0 %v430
  %v432 = vpop.xlane.xlu0 %431
  %v433 = vsel %vm398, %v423, 0.0
  %434 = vadd.xlane.f32.xlu0 %v433
  %v435 = vpop.xlane.xlu0 %434
  %v436 = vsel %vm398, %v425, 0.0
  %437 = vadd.xlane.f32.xlu0 %v436
  %v438 = vpop.xlane.xlu0 %437
  %v439 = vsel %vm398, %v427, 0.0
  %440 = vadd.xlane.f32.xlu0 %v439
  %v441 = vpop.xlane.xlu0 %440
  %v442 = vsel %vm411, %v429, 0.0
  %443 = vadd.xlane.f32.xlu0 %v442
  %v444 = vpop.xlane.xlu0 %443
  %v445 = vrcp.pop %v432
  %v446 = vrcp.pop %v435
  %v447 = vrcp.pop %v438
  %v448 = vrcp.pop %v441
  %v449 = vrcp.pop %v444
  %v450 = vmul.f32 %v421, %v445
  %v451 = vmul.f32 %v423, %v446
  %v452 = vmul.f32 %v425, %v447
  %v453 = vmul.f32 %v427, %v448
  %v454 = vmul.f32 %v429, %v449
  %v455 = vpack.c.bf16 %v451, %v450
  %v456 = vpack.c.bf16 %v453, %v452
  %v457 = vpack.c.bf16 %v454, %v454
  %458 = vrot.lane.b32.xlu0 %v334, 64
  %v459 = vpop.permute.xlu0 %458
  %460 = vrot.lane.b32.xlu0 %v335, 64
  %v461 = vpop.permute.xlu0 %460
  %462 = vrot.lane.b32.xlu0 %v336, 64
  %v463 = vpop.permute.xlu0 %462
  %v467 = vsel %vm398, %v455, 0
  %v470 = vsel %vm398, %v456, 0
  %v473 = vsel %vm398, %v457, 0
  %vm475 = vcmask 1040384
  %v477 = vsel %vm475, %v463, 0
  %479 = vmatpush.bf16.msra.mxu0 0
  %480 = vmatpush.bf16.msra.mxu0 0
  %481 = vmatpush.bf16.msra.mxu0 0
  %482 = vmatpush.bf16.msra.mxu0 0
  %483 = vmatpush.bf16.msra.mxu0 0
  %484 = vmatpush.bf16.msra.mxu0 %v477
  %485 = vmatpush.bf16.msra.mxu0 %v461
  %486 = vmatpush.bf16.msra.mxu0 %v459
  %487 = vmatmul.bf16.gmra.mxu0 %v467
  %v488 = vpop.f32.mrf.mxu0
  %v489 = vadd.f32 0.0, %v488
  %v490 = vpop.f32.mrf.mxu0
  %v491 = vadd.f32 0.0, %v490
  %492 = vmatmul.bf16.gmra.mxu0 %v470
  %v493 = vpop.f32.mrf.mxu0
  %v494 = vadd.f32 0.0, %v493
  %v495 = vpop.f32.mrf.mxu0
  %v496 = vadd.f32 0.0, %v495
  %497 = vmatmul.bf16.gmra.mxu0 %v473
  %v498 = vpop.f32.mrf.mxu0
  %v499 = vadd.f32 0.0, %v498
  %v500 = vpop.f32.mrf.mxu0
  %501 = vdwg.mxu0
  %v502 = vpack.c.bf16 %v491, %v489
  %v503 = vpack.c.bf16 %v496, %v494
  %v504 = vpack.c.bf16 %v499, %v499
  %505 = vrot.lane.b32.xlu0 %v334, 112
  %v506 = vpop.permute.xlu0 %505
  %507 = vrot.lane.b32.xlu0 %v335, 112
  %v508 = vpop.permute.xlu0 %507
  %509 = vrot.lane.b32.xlu0 %v336, 112
  %v510 = vpop.permute.xlu0 %509
  %511 = vrot.lane.b32.xlu0 %v334, 80
  %v512 = vpop.permute.xlu0 %511
  %513 = vrot.lane.b32.xlu0 %v335, 80
  %v514 = vpop.permute.xlu0 %513
  %515 = vrot.lane.b32.xlu0 %v336, 80
  %v516 = vpop.permute.xlu0 %515
  %v518 = vsel %vm346, %v506, 0
  %v521 = vsel %vm346, %v508, 0
  %v524 = vsel %vm346, %v510, 0
  %v527 = vsel %vm346, %v512, 0
  %v530 = vsel %vm346, %v514, 0
  %v533 = vsel %vm346, %v516, 0
  %535 = vmatpush.bf16.xpose.msra.mxu0 0
  %536 = vmatpush.bf16.xpose.msra.mxu0 0
  %537 = vmatpush.bf16.xpose.msra.mxu0 0
  %538 = vmatpush.bf16.xpose.msra.mxu0 0
  %539 = vmatpush.bf16.xpose.msra.mxu0 0
  %540 = vmatpush.bf16.xpose.msra.mxu0 %v533
  %541 = vmatpush.bf16.xpose.msra.mxu0 %v530
  %542 = vmatpush.bf16.xpose.msra.mxu0 %v527
  %543 = vmatmul.bf16.gmra.mxu0 %v518
  %v544 = vpop.f32.mrf.mxu0
  %v545 = vadd.f32 0.0, %v544
  %v546 = vpop.f32.mrf.mxu0
  %v547 = vadd.f32 0.0, %v546
  %548 = vmatmul.bf16.gmra.mxu0 %v521
  %v549 = vpop.f32.mrf.mxu0
  %v550 = vadd.f32 0.0, %v549
  %v551 = vpop.f32.mrf.mxu0
  %v552 = vadd.f32 0.0, %v551
  %553 = vmatmul.bf16.gmra.mxu0 %v524
  %v554 = vpop.f32.mrf.mxu0
  %v555 = vadd.f32 0.0, %v554
  %v556 = vpop.f32.mrf.mxu0
  %557 = vdwg.mxu0
  %v558 = vmul.f32 %v545, 0.25
  %v559 = vmul.f32 %v547, 0.25
  %v560 = vmul.f32 %v550, 0.25
  %v561 = vmul.f32 %v552, 0.25
  %v562 = vmul.f32 %v555, 0.25
  %v563 = vadd.f32 %v558, %v133
  %v564 = vadd.f32 %v559, %v134
  %v565 = vadd.f32 %v560, %v135
  %v566 = vadd.f32 %v561, %v136
  %v567 = vadd.f32 %v562, %v137
  %v568 = vsel %vm398, %v563, -inf
  %569 = vmax.xlane.f32.xlu0 %v568
  %v570 = vpop.xlane.xlu0 %569
  %v571 = vsel %vm398, %v564, -inf
  %572 = vmax.xlane.f32.xlu0 %v571
  %v573 = vpop.xlane.xlu0 %572
  %v574 = vsel %vm398, %v565, -inf
  %575 = vmax.xlane.f32.xlu0 %v574
  %v576 = vpop.xlane.xlu0 %575
  %v577 = vsel %vm398, %v566, -inf
  %578 = vmax.xlane.f32.xlu0 %v577
  %v579 = vpop.xlane.xlu0 %578
  %v580 = vsel %vm411, %v567, -inf
  %581 = vmax.xlane.f32.xlu0 %v580
  %v582 = vpop.xlane.xlu0 %581
  %v583 = vsub.f32 %v563, %v570
  %v584 = vsub.f32 %v564, %v573
  %v585 = vsub.f32 %v565, %v576
  %v586 = vsub.f32 %v566, %v579
  %v587 = vsub.f32 %v567, %v582
  %v588 = vmul.f32 %v583, 1.442695
  %v589 = vpow.pop %v588
  %v590 = vmul.f32 %v584, 1.442695
  %v591 = vpow.pop %v590
  %v592 = vmul.f32 %v585, 1.442695
  %v593 = vpow.pop %v592
  %v594 = vmul.f32 %v586, 1.442695
  %v595 = vpow.pop %v594
  %v596 = vmul.f32 %v587, 1.442695
  %v597 = vpow.pop %v596
  %v598 = vsel %vm398, %v589, 0.0
  %599 = vadd.xlane.f32.xlu0 %v598
  %v600 = vpop.xlane.xlu0 %599
  %v601 = vsel %vm398, %v591, 0.0
  %602 = vadd.xlane.f32.xlu0 %v601
  %v603 = vpop.xlane.xlu0 %602
  %v604 = vsel %vm398, %v593, 0.0
  %605 = vadd.xlane.f32.xlu0 %v604
  %v606 = vpop.xlane.xlu0 %605
  %v607 = vsel %vm398, %v595, 0.0
  %608 = vadd.xlane.f32.xlu0 %v607
  %v609 = vpop.xlane.xlu0 %608
  %v610 = vsel %vm411, %v597, 0.0
  %611 = vadd.xlane.f32.xlu0 %v610
  %v612 = vpop.xlane.xlu0 %611
  %v613 = vrcp.pop %v600
  %v614 = vrcp.pop %v603
  %v615 = vrcp.pop %v606
  %v616 = vrcp.pop %v609
  %v617 = vrcp.pop %v612
  %v618 = vmul.f32 %v589, %v613
  %v619 = vmul.f32 %v591, %v614
  %v620 = vmul.f32 %v593, %v615
  %v621 = vmul.f32 %v595, %v616
  %v622 = vmul.f32 %v597, %v617
  %v623 = vpack.c.bf16 %v619, %v618
  %v624 = vpack.c.bf16 %v621, %v620
  %v625 = vpack.c.bf16 %v622, %v622
  %626 = vrot.lane.b32.xlu0 %v334, 48
  %v627 = vpop.permute.xlu0 %626
  %628 = vrot.lane.b32.xlu0 %v335, 48
  %v629 = vpop.permute.xlu0 %628
  %630 = vrot.lane.b32.xlu0 %v336, 48
  %v631 = vpop.permute.xlu0 %630
  %v635 = vsel %vm398, %v623, 0
  %v638 = vsel %vm398, %v624, 0
  %v641 = vsel %vm398, %v625, 0
  %v644 = vsel %vm475, %v631, 0
  %646 = vmatpush.bf16.msra.mxu0 0
  %647 = vmatpush.bf16.msra.mxu0 0
  %648 = vmatpush.bf16.msra.mxu0 0
  %649 = vmatpush.bf16.msra.mxu0 0
  %650 = vmatpush.bf16.msra.mxu0 0
  %651 = vmatpush.bf16.msra.mxu0 %v644
  %652 = vmatpush.bf16.msra.mxu0 %v629
  %653 = vmatpush.bf16.msra.mxu0 %v627
  %654 = vmatmul.bf16.gmra.mxu0 %v635
  %v655 = vpop.f32.mrf.mxu0
  %v656 = vadd.f32 0.0, %v655
  %v657 = vpop.f32.mrf.mxu0
  %v658 = vadd.f32 0.0, %v657
  %659 = vmatmul.bf16.gmra.mxu0 %v638
  %v660 = vpop.f32.mrf.mxu0
  %v661 = vadd.f32 0.0, %v660
  %v662 = vpop.f32.mrf.mxu0
  %v663 = vadd.f32 0.0, %v662
  %664 = vmatmul.bf16.gmra.mxu0 %v641
  %v665 = vpop.f32.mrf.mxu0
  %v666 = vadd.f32 0.0, %v665
  %v667 = vpop.f32.mrf.mxu0
  %668 = vdwg.mxu0
  %v669 = vpack.c.bf16 %v658, %v656
  %v670 = vpack.c.bf16 %v663, %v661
  %v671 = vpack.c.bf16 %v666, %v666
  %v674 = vunpack.c.l.b16 %v332
  %v675 = vunpack.c.l.b16 %v333
  %v676 = vpack.c.b16 %v675, %v674
  %v679 = vsel %vm346, %v669, 0
  %v682 = vsel %vm346, %v670, 0
  %v685 = vsel %vm346, %v671, 0
  %687 = vmatpush.bf16.msra.mxu0 0
  %688 = vmatpush.bf16.msra.mxu0 0
  %689 = vmatpush.bf16.msra.mxu0 0
  %690 = vmatpush.bf16.msra.mxu0 0
  %691 = vmatpush.bf16.msra.mxu0 0
  %692 = vmatpush.bf16.msra.mxu0 0
  %693 = vmatpush.bf16.msra.mxu0 0
  %694 = vmatpush.bf16.msra.mxu0 %v676
  %695 = vmatmul.bf16.gmra.mxu0 %v679
  %v696 = vpop.f32.mrf.mxu0
  %v697 = vadd.f32 0.0, %v696
  %v698 = vpop.f32.mrf.mxu0
  %v699 = vadd.f32 0.0, %v698
  %700 = vmatmul.bf16.gmra.mxu0 %v682
  %v701 = vpop.f32.mrf.mxu0
  %v702 = vadd.f32 0.0, %v701
  %v703 = vpop.f32.mrf.mxu0
  %v704 = vadd.f32 0.0, %v703
  %705 = vmatmul.bf16.gmra.mxu0 %v685
  %v706 = vpop.f32.mrf.mxu0
  %v707 = vadd.f32 0.0, %v706
  %v708 = vpop.f32.mrf.mxu0
  %709 = vdwg.mxu0
  %v712 = vunpack.c.l.b16 %v330
  %v713 = vunpack.c.l.b16 %v331
  %v714 = vpack.c.b16 %v713, %v712
  %v717 = vsel %vm346, %v502, 0
  %v720 = vsel %vm346, %v503, 0
  %v723 = vsel %vm346, %v504, 0
  %725 = vmatpush.bf16.msra.mxu0 0
  %726 = vmatpush.bf16.msra.mxu0 0
  %727 = vmatpush.bf16.msra.mxu0 0
  %728 = vmatpush.bf16.msra.mxu0 0
  %729 = vmatpush.bf16.msra.mxu0 0
  %730 = vmatpush.bf16.msra.mxu0 0
  %731 = vmatpush.bf16.msra.mxu0 0
  %732 = vmatpush.bf16.msra.mxu0 %v714
  %733 = vmatmul.bf16.gmra.mxu0 %v717
  %v734 = vpop.f32.mrf.mxu0
  %v735 = vadd.f32 %v697, %v734
  %v736 = vpop.f32.mrf.mxu0
  %v737 = vadd.f32 %v699, %v736
  %738 = vmatmul.bf16.gmra.mxu0 %v720
  %v739 = vpop.f32.mrf.mxu0
  %v740 = vadd.f32 %v702, %v739
  %v741 = vpop.f32.mrf.mxu0
  %v742 = vadd.f32 %v704, %v741
  %743 = vmatmul.bf16.gmra.mxu0 %v723
  %v744 = vpop.f32.mrf.mxu0
  %v745 = vadd.f32 %v707, %v744
  %v746 = vpop.f32.mrf.mxu0
  %747 = vdwg.mxu0
  %v748 = vadd.f32 %v119, %v735
  %v749 = vadd.f32 %v122, %v737
  %v750 = vadd.f32 %v125, %v740
  %v751 = vadd.f32 %v128, %v742
  %v752 = vadd.f32 %v131, %v745
  %v753 = vld [vmem:[%s9] sm:$0x1]
  %v755 = vperm.slane %v753, 0
  %v757 = vadd.f32 %v748, %v755
  %v758 = vadd.f32 %v749, %v755
  %v759 = vadd.f32 %v750, %v755
  %v760 = vadd.f32 %v751, %v755
  %v761 = vadd.f32 %v752, %v755
  %v762 = vld [vmem:[%s10] sm:$0x1]
  %v763 = vld [vmem:[%s11] sm:$0x1]
  %v764 = vsel %vm140, %v757, 0.0
  %765 = vadd.xlane.f32.xlu0 %v764
  %v766 = vpop.xlane.xlu0 %765
  %v767 = vsel %vm140, %v758, 0.0
  %768 = vadd.xlane.f32.xlu0 %v767
  %v769 = vpop.xlane.xlu0 %768
  %v770 = vsel %vm140, %v759, 0.0
  %771 = vadd.xlane.f32.xlu0 %v770
  %v772 = vpop.xlane.xlu0 %771
  %v773 = vsel %vm140, %v760, 0.0
  %774 = vadd.xlane.f32.xlu0 %v773
  %v775 = vpop.xlane.xlu0 %774
  %v776 = vsel %vm153, %v761, 0.0
  %777 = vadd.xlane.f32.xlu0 %v776
  %v778 = vpop.xlane.xlu0 %777
  %v779 = vmul.f32 %v766, %v163
  %v780 = vmul.f32 %v769, %v163
  %v781 = vmul.f32 %v772, %v163
  %v782 = vmul.f32 %v775, %v163
  %v783 = vmul.f32 %v778, %v163
  %v784 = vsub.f32 %v757, %v779
  %v785 = vsub.f32 %v758, %v780
  %v786 = vsub.f32 %v759, %v781
  %v787 = vsub.f32 %v760, %v782
  %v788 = vsub.f32 %v761, %v783
  %v789 = vmul.f32 %v784, %v784
  %v790 = vmul.f32 %v785, %v785
  %v791 = vmul.f32 %v786, %v786
  %v792 = vmul.f32 %v787, %v787
  %v793 = vmul.f32 %v788, %v788
  %v794 = vsel %vm140, %v789, 0.0
  %795 = vadd.xlane.f32.xlu0 %v794
  %v796 = vpop.xlane.xlu0 %795
  %v797 = vsel %vm140, %v790, 0.0
  %798 = vadd.xlane.f32.xlu0 %v797
  %v799 = vpop.xlane.xlu0 %798
  %v800 = vsel %vm140, %v791, 0.0
  %801 = vadd.xlane.f32.xlu0 %v800
  %v802 = vpop.xlane.xlu0 %801
  %v803 = vsel %vm140, %v792, 0.0
  %804 = vadd.xlane.f32.xlu0 %v803
  %v805 = vpop.xlane.xlu0 %804
  %v806 = vsel %vm153, %v793, 0.0
  %807 = vadd.xlane.f32.xlu0 %v806
  %v808 = vpop.xlane.xlu0 %807
  %v809 = vmul.f32 %v796, %v163
  %v810 = vmul.f32 %v799, %v163
  %v811 = vmul.f32 %v802, %v163
  %v812 = vmul.f32 %v805, %v163
  %v813 = vmul.f32 %v808, %v163
  %v814 = vadd.f32 %v809, 1e-05
  %v815 = vadd.f32 %v810, 1e-05
  %v816 = vadd.f32 %v811, 1e-05
  %v817 = vadd.f32 %v812, 1e-05
  %v818 = vadd.f32 %v813, 1e-05
  %v819 = vrsqrt.pop %v814
  %v820 = vmul.f32 %v819, %v814
  %v821 = vmul.f32 %v820, %v819
  %v822 = vmul.f32 0.5, %v821
  %v823 = vsub.f32 1.5, %v822
  %v824 = vmul.f32 %v819, %v823
  %vm825 = vweird.f32 %v814
  %vm826 = vweird.f32 %v819
  %vm827 = vmor %vm825, %vm826
  %v828 = vsel %vm827, %v819, %v824
  %v829 = vrsqrt.pop %v815
  %v830 = vmul.f32 %v829, %v815
  %v831 = vmul.f32 %v830, %v829
  %v832 = vmul.f32 0.5, %v831
  %v833 = vsub.f32 1.5, %v832
  %v834 = vmul.f32 %v829, %v833
  %vm835 = vweird.f32 %v815
  %vm836 = vweird.f32 %v829
  %vm837 = vmor %vm835, %vm836
  %v838 = vsel %vm837, %v829, %v834
  %v839 = vrsqrt.pop %v816
  %v840 = vmul.f32 %v839, %v816
  %v841 = vmul.f32 %v840, %v839
  %v842 = vmul.f32 0.5, %v841
  %v843 = vsub.f32 1.5, %v842
  %v844 = vmul.f32 %v839, %v843
  %vm845 = vweird.f32 %v816
  %vm846 = vweird.f32 %v839
  %vm847 = vmor %vm845, %vm846
  %v848 = vsel %vm847, %v839, %v844
  %v849 = vrsqrt.pop %v817
  %v850 = vmul.f32 %v849, %v817
  %v851 = vmul.f32 %v850, %v849
  %v852 = vmul.f32 0.5, %v851
  %v853 = vsub.f32 1.5, %v852
  %v854 = vmul.f32 %v849, %v853
  %vm855 = vweird.f32 %v817
  %vm856 = vweird.f32 %v849
  %vm857 = vmor %vm855, %vm856
  %v858 = vsel %vm857, %v849, %v854
  %v859 = vrsqrt.pop %v818
  %v860 = vmul.f32 %v859, %v818
  %v861 = vmul.f32 %v860, %v859
  %v862 = vmul.f32 0.5, %v861
  %v863 = vsub.f32 1.5, %v862
  %v864 = vmul.f32 %v859, %v863
  %vm865 = vweird.f32 %v818
  %vm866 = vweird.f32 %v859
  %vm867 = vmor %vm865, %vm866
  %v868 = vsel %vm867, %v859, %v864
  %v869 = vmul.f32 %v784, %v828
  %v870 = vmul.f32 %v785, %v838
  %v871 = vmul.f32 %v786, %v848
  %v872 = vmul.f32 %v787, %v858
  %v873 = vmul.f32 %v788, %v868
  %v875 = vperm.slane %v762, 0
  %v877 = vmul.f32 %v869, %v875
  %v878 = vmul.f32 %v870, %v875
  %v879 = vmul.f32 %v871, %v875
  %v880 = vmul.f32 %v872, %v875
  %v881 = vmul.f32 %v873, %v875
  %v883 = vperm.slane %v763, 0
  %v885 = vadd.f32 %v877, %v883
  %v886 = vadd.f32 %v878, %v883
  %v887 = vadd.f32 %v879, %v883
  %v888 = vadd.f32 %v880, %v883
  %v889 = vadd.f32 %v881, %v883
  %v890 = vpack.c.bf16 %v886, %v885
  %v891 = vpack.c.bf16 %v888, %v887
  %v892 = vpack.c.bf16 %v889, %v889
  %v893 = vld [vmem:[%s12] sm:$0xf]
  %v894 = vld [vmem:[%s12 + $0x4] sm:$0xf]
  %v895 = vld [vmem:[%s12 + $0x8] sm:$0xf]
  %v896 = vld [vmem:[%s12 + $0xc] sm:$0xf]
  %v897 = vld [vmem:[%s13] sm:$0x1]
  %v899 = vperm.slane %v897, 0
  %v905 = vunpack.c.l.b16 %v893
  %v906 = vunpack.c.l.b16 %v894
  %v907 = vunpack.c.l.b16 %v895
  %v908 = vunpack.c.l.b16 %v896
  %v909 = vpack.c.b16 %v906, %v905
  %v910 = vpack.c.b16 %v908, %v907
  %v914 = vsel %vm140, %v890, 0
  %v917 = vsel %vm140, %v891, 0
  %v920 = vsel %vm140, %v892, 0
  %922 = vmatpush.bf16.msra.mxu0 0
  %923 = vmatpush.bf16.msra.mxu0 0
  %924 = vmatpush.bf16.msra.mxu0 0
  %925 = vmatpush.bf16.msra.mxu0 0
  %926 = vmatpush.bf16.msra.mxu0 0
  %927 = vmatpush.bf16.msra.mxu0 0
  %928 = vmatpush.bf16.msra.mxu0 %v910
  %929 = vmatpush.bf16.msra.mxu0 %v909
  %930 = vmatmul.bf16.gmra.mxu0 %v914
  %v931 = vpop.f32.mrf.mxu0
  %v932 = vadd.f32 %v899, %v931
  %v933 = vpop.f32.mrf.mxu0
  %v934 = vadd.f32 %v899, %v933
  %935 = vmatmul.bf16.gmra.mxu0 %v917
  %v936 = vpop.f32.mrf.mxu0
  %v937 = vadd.f32 %v899, %v936
  %v938 = vpop.f32.mrf.mxu0
  %v939 = vadd.f32 %v899, %v938
  %940 = vmatmul.bf16.gmra.mxu0 %v920
  %v941 = vpop.f32.mrf.mxu0
  %v942 = vadd.f32 %v899, %v941
  %v943 = vpop.f32.mrf.mxu0
  %944 = vdwg.mxu0
  %v945 = vmul.f32 %v932, 0.5
  %v946 = vmul.f32 %v934, 0.5
  %v947 = vmul.f32 %v937, 0.5
  %v948 = vmul.f32 %v939, 0.5
  %v949 = vmul.f32 %v942, 0.5
  %v950 = vmul.f32 %v932, 0.044715
  %v951 = vmul.f32 %v934, 0.044715
  %v952 = vmul.f32 %v937, 0.044715
  %v953 = vmul.f32 %v939, 0.044715
  %v954 = vmul.f32 %v942, 0.044715
  %v955 = vmul.f32 %v950, %v932
  %v956 = vmul.f32 %v951, %v934
  %v957 = vmul.f32 %v952, %v937
  %v958 = vmul.f32 %v953, %v939
  %v959 = vmul.f32 %v954, %v942
  %v960 = vmul.f32 %v955, %v932
  %v961 = vmul.f32 %v956, %v934
  %v962 = vmul.f32 %v957, %v937
  %v963 = vmul.f32 %v958, %v939
  %v964 = vmul.f32 %v959, %v942
  %v965 = vadd.f32 %v932, %v960
  %v966 = vadd.f32 %v934, %v961
  %v967 = vadd.f32 %v937, %v962
  %v968 = vadd.f32 %v939, %v963
  %v969 = vadd.f32 %v942, %v964
  %v970 = vmul.f32 %v965, 0.7978846
  %v971 = vmul.f32 %v966, 0.7978846
  %v972 = vmul.f32 %v967, 0.7978846
  %v973 = vmul.f32 %v968, 0.7978846
  %v974 = vmul.f32 %v969, 0.7978846
  %v975 = vtanh.pop %v970
  %v976 = vtanh.pop %v971
  %v977 = vtanh.pop %v972
  %v978 = vtanh.pop %v973
  %v979 = vtanh.pop %v974
  %v980 = vadd.f32 %v975, 1.0
  %v981 = vadd.f32 %v976, 1.0
  %v982 = vadd.f32 %v977, 1.0
  %v983 = vadd.f32 %v978, 1.0
  %v984 = vadd.f32 %v979, 1.0
  %v985 = vmul.f32 %v945, %v980
  %v986 = vmul.f32 %v946, %v981
  %v987 = vmul.f32 %v947, %v982
  %v988 = vmul.f32 %v948, %v983
  %v989 = vmul.f32 %v949, %v984
  %v990 = vpack.c.bf16 %v986, %v985
  %v991 = vpack.c.bf16 %v988, %v987
  %v992 = vpack.c.bf16 %v989, %v989
  %v993 = vld [vmem:[%s14] sm:$0xf]
  %v994 = vld [vmem:[%s14 + $0x4] sm:$0xf]
  %v995 = vld [vmem:[%s14 + $0x8] sm:$0xf]
  %v996 = vld [vmem:[%s14 + $0xc] sm:$0xf]
  %v997 = vld [vmem:[%s14 + $0x10] sm:$0xf]
  %v998 = vld [vmem:[%s14 + $0x14] sm:$0xf]
  %v999 = vld [vmem:[%s14 + $0x18] sm:$0xf]
  %v1000 = vld [vmem:[%s14 + $0x1c] sm:$0xf]
  %v1001 = vld [vmem:[%s14 + $0x20] sm:$0xf]
  %v1002 = vld [vmem:[%s14 + $0x24] sm:$0xf]
  %v1003 = vld [vmem:[%s14 + $0x28] sm:$0xf]
  %v1004 = vld [vmem:[%s14 + $0x2c] sm:$0xf]
  %v1005 = vld [vmem:[%s14 + $0x30] sm:$0xf]
  %v1006 = vld [vmem:[%s14 + $0x34] sm:$0xf]
  %v1007 = vld [vmem:[%s14 + $0x38] sm:$0xf]
  %v1008 = vld [vmem:[%s14 + $0x3c] sm:$0xf]
  %v1009 = vld [vmem:[%s15] sm:$0x1]
  %v1011 = vperm.slane %v1009, 0
  %v1029 = vunpack.c.l.b16 %v993
  %v1030 = vunpack.c.l.b16 %v994
  %v1031 = vunpack.c.l.b16 %v995
  %v1032 = vunpack.c.l.b16 %v996
  %v1033 = vunpack.c.l.b16 %v997
  %v1034 = vunpack.c.l.b16 %v998
  %v1035 = vunpack.c.l.b16 %v999
  %v1036 = vunpack.c.l.b16 %v1000
  %v1037 = vunpack.c.l.b16 %v1001
  %v1038 = vunpack.c.l.b16 %v1002
  %v1039 = vunpack.c.l.b16 %v1003
  %v1040 = vunpack.c.l.b16 %v1004
  %v1041 = vunpack.c.l.b16 %v1005
  %v1042 = vunpack.c.l.b16 %v1006
  %v1043 = vunpack.c.l.b16 %v1007
  %v1044 = vunpack.c.l.b16 %v1008
  %v1045 = vpack.c.b16 %v1030, %v1029
  %v1046 = vpack.c.b16 %v1032, %v1031
  %v1047 = vpack.c.b16 %v1034, %v1033
  %v1048 = vpack.c.b16 %v1036, %v1035
  %v1049 = vpack.c.b16 %v1038, %v1037
  %v1050 = vpack.c.b16 %v1040, %v1039
  %v1051 = vpack.c.b16 %v1042, %v1041
  %v1052 = vpack.c.b16 %v1044, %v1043
  %1061 = vmatpush.bf16.msra.mxu0 %v1052
  %1062 = vmatpush.bf16.msra.mxu0 %v1051
  %1063 = vmatpush.bf16.msra.mxu0 %v1050
  %1064 = vmatpush.bf16.msra.mxu0 %v1049
  %1065 = vmatpush.bf16.msra.mxu0 %v1048
  %1066 = vmatpush.bf16.msra.mxu0 %v1047
  %1067 = vmatpush.bf16.msra.mxu0 %v1046
  %1068 = vmatpush.bf16.msra.mxu0 %v1045
  %1069 = vmatmul.bf16.gmra.mxu0 %v990
  %v1070 = vpop.f32.mrf.mxu0
  %v1071 = vadd.f32 %v1011, %v1070
  %v1072 = vpop.f32.mrf.mxu0
  %v1073 = vadd.f32 %v1011, %v1072
  %1074 = vmatmul.bf16.gmra.mxu0 %v991
  %v1075 = vpop.f32.mrf.mxu0
  %v1076 = vadd.f32 %v1011, %v1075
  %v1077 = vpop.f32.mrf.mxu0
  %v1078 = vadd.f32 %v1011, %v1077
  %1079 = vmatmul.bf16.gmra.mxu0 %v992
  %v1080 = vpop.f32.mrf.mxu0
  %v1081 = vadd.f32 %v1011, %v1080
  %v1082 = vpop.f32.mrf.mxu0
  %1083 = vdwg.mxu0
  %v1084 = vadd.f32 %v757, %v1071
  %v1085 = vadd.f32 %v758, %v1073
  %v1086 = vadd.f32 %v759, %v1076
  %v1087 = vadd.f32 %v760, %v1078
  %v1088 = vadd.f32 %v761, %v1081
  %s1089 = scalar_lea.vmem %s4, 1
  %v1090 = vld [vmem:[%s1089] sm:$0x1]
  %s1091 = scalar_lea.vmem %s5, 1
  %v1092 = vld [vmem:[%s1091] sm:$0x1]
  %v1093 = vsel %vm140, %v1084, 0.0
  %1094 = vadd.xlane.f32.xlu0 %v1093
  %v1095 = vpop.xlane.xlu0 %1094
  %v1096 = vsel %vm140, %v1085, 0.0
  %1097 = vadd.xlane.f32.xlu0 %v1096
  %v1098 = vpop.xlane.xlu0 %1097
  %v1099 = vsel %vm140, %v1086, 0.0
  %1100 = vadd.xlane.f32.xlu0 %v1099
  %v1101 = vpop.xlane.xlu0 %1100
  %v1102 = vsel %vm140, %v1087, 0.0
  %1103 = vadd.xlane.f32.xlu0 %v1102
  %v1104 = vpop.xlane.xlu0 %1103
  %v1105 = vsel %vm153, %v1088, 0.0
  %1106 = vadd.xlane.f32.xlu0 %v1105
  %v1107 = vpop.xlane.xlu0 %1106
  %v1108 = vmul.f32 %v1095, %v163
  %v1109 = vmul.f32 %v1098, %v163
  %v1110 = vmul.f32 %v1101, %v163
  %v1111 = vmul.f32 %v1104, %v163
  %v1112 = vmul.f32 %v1107, %v163
  %v1113 = vsub.f32 %v1084, %v1108
  %v1114 = vsub.f32 %v1085, %v1109
  %v1115 = vsub.f32 %v1086, %v1110
  %v1116 = vsub.f32 %v1087, %v1111
  %v1117 = vsub.f32 %v1088, %v1112
  %v1118 = vmul.f32 %v1113, %v1113
  %v1119 = vmul.f32 %v1114, %v1114
  %v1120 = vmul.f32 %v1115, %v1115
  %v1121 = vmul.f32 %v1116, %v1116
  %v1122 = vmul.f32 %v1117, %v1117
  %v1123 = vsel %vm140, %v1118, 0.0
  %1124 = vadd.xlane.f32.xlu0 %v1123
  %v1125 = vpop.xlane.xlu0 %1124
  %v1126 = vsel %vm140, %v1119, 0.0
  %1127 = vadd.xlane.f32.xlu0 %v1126
  %v1128 = vpop.xlane.xlu0 %1127
  %v1129 = vsel %vm140, %v1120, 0.0
  %1130 = vadd.xlane.f32.xlu0 %v1129
  %v1131 = vpop.xlane.xlu0 %1130
  %v1132 = vsel %vm140, %v1121, 0.0
  %1133 = vadd.xlane.f32.xlu0 %v1132
  %v1134 = vpop.xlane.xlu0 %1133
  %v1135 = vsel %vm153, %v1122, 0.0
  %1136 = vadd.xlane.f32.xlu0 %v1135
  %v1137 = vpop.xlane.xlu0 %1136
  %v1138 = vmul.f32 %v1125, %v163
  %v1139 = vmul.f32 %v1128, %v163
  %v1140 = vmul.f32 %v1131, %v163
  %v1141 = vmul.f32 %v1134, %v163
  %v1142 = vmul.f32 %v1137, %v163
  %v1143 = vadd.f32 %v1138, 1e-05
  %v1144 = vadd.f32 %v1139, 1e-05
  %v1145 = vadd.f32 %v1140, 1e-05
  %v1146 = vadd.f32 %v1141, 1e-05
  %v1147 = vadd.f32 %v1142, 1e-05
  %v1148 = vrsqrt.pop %v1143
  %v1149 = vmul.f32 %v1148, %v1143
  %v1150 = vmul.f32 %v1149, %v1148
  %v1151 = vmul.f32 0.5, %v1150
  %v1152 = vsub.f32 1.5, %v1151
  %v1153 = vmul.f32 %v1148, %v1152
  %vm1154 = vweird.f32 %v1143
  %vm1155 = vweird.f32 %v1148
  %vm1156 = vmor %vm1154, %vm1155
  %v1157 = vsel %vm1156, %v1148, %v1153
  %v1158 = vrsqrt.pop %v1144
  %v1159 = vmul.f32 %v1158, %v1144
  %v1160 = vmul.f32 %v1159, %v1158
  %v1161 = vmul.f32 0.5, %v1160
  %v1162 = vsub.f32 1.5, %v1161
  %v1163 = vmul.f32 %v1158, %v1162
  %vm1164 = vweird.f32 %v1144
  %vm1165 = vweird.f32 %v1158
  %vm1166 = vmor %vm1164, %vm1165
  %v1167 = vsel %vm1166, %v1158, %v1163
  %v1168 = vrsqrt.pop %v1145
  %v1169 = vmul.f32 %v1168, %v1145
  %v1170 = vmul.f32 %v1169, %v1168
  %v1171 = vmul.f32 0.5, %v1170
  %v1172 = vsub.f32 1.5, %v1171
  %v1173 = vmul.f32 %v1168, %v1172
  %vm1174 = vweird.f32 %v1145
  %vm1175 = vweird.f32 %v1168
  %vm1176 = vmor %vm1174, %vm1175
  %v1177 = vsel %vm1176, %v1168, %v1173
  %v1178 = vrsqrt.pop %v1146
  %v1179 = vmul.f32 %v1178, %v1146
  %v1180 = vmul.f32 %v1179, %v1178
  %v1181 = vmul.f32 0.5, %v1180
  %v1182 = vsub.f32 1.5, %v1181
  %v1183 = vmul.f32 %v1178, %v1182
  %vm1184 = vweird.f32 %v1146
  %vm1185 = vweird.f32 %v1178
  %vm1186 = vmor %vm1184, %vm1185
  %v1187 = vsel %vm1186, %v1178, %v1183
  %v1188 = vrsqrt.pop %v1147
  %v1189 = vmul.f32 %v1188, %v1147
  %v1190 = vmul.f32 %v1189, %v1188
  %v1191 = vmul.f32 0.5, %v1190
  %v1192 = vsub.f32 1.5, %v1191
  %v1193 = vmul.f32 %v1188, %v1192
  %vm1194 = vweird.f32 %v1147
  %vm1195 = vweird.f32 %v1188
  %vm1196 = vmor %vm1194, %vm1195
  %v1197 = vsel %vm1196, %v1188, %v1193
  %v1198 = vmul.f32 %v1113, %v1157
  %v1199 = vmul.f32 %v1114, %v1167
  %v1200 = vmul.f32 %v1115, %v1177
  %v1201 = vmul.f32 %v1116, %v1187
  %v1202 = vmul.f32 %v1117, %v1197
  %v1204 = vperm.slane %v1090, 0
  %v1206 = vmul.f32 %v1198, %v1204
  %v1207 = vmul.f32 %v1199, %v1204
  %v1208 = vmul.f32 %v1200, %v1204
  %v1209 = vmul.f32 %v1201, %v1204
  %v1210 = vmul.f32 %v1202, %v1204
  %v1212 = vperm.slane %v1092, 0
  %v1214 = vadd.f32 %v1206, %v1212
  %v1215 = vadd.f32 %v1207, %v1212
  %v1216 = vadd.f32 %v1208, %v1212
  %v1217 = vadd.f32 %v1209, %v1212
  %v1218 = vadd.f32 %v1210, %v1212
  %v1219 = vpack.c.bf16 %v1215, %v1214
  %v1220 = vpack.c.bf16 %v1217, %v1216
  %v1221 = vpack.c.bf16 %v1218, %v1218
  %s1222 = scalar_lea.vmem %s6, 16
  %v1223 = vld [vmem:[%s1222] sm:$0xf]
  %v1224 = vld [vmem:[%s1222 + $0x4] sm:$0xf]
  %v1225 = vld [vmem:[%s1222 + $0x8] sm:$0xf]
  %v1226 = vld [vmem:[%s1222 + $0xc] sm:$0xf]
  %s1227 = scalar_lea.vmem %s7, 1
  %v1228 = vld [vmem:[%s1227] sm:$0x1]
  %v1230 = vperm.slane %v1228, 0
  %v1236 = vunpack.c.l.b16 %v1223
  %v1237 = vunpack.c.l.b16 %v1224
  %v1238 = vunpack.c.l.b16 %v1225
  %v1239 = vunpack.c.l.b16 %v1226
  %v1240 = vpack.c.b16 %v1237, %v1236
  %v1241 = vpack.c.b16 %v1239, %v1238
  %v1245 = vsel %vm140, %v1219, 0
  %v1248 = vsel %vm140, %v1220, 0
  %v1251 = vsel %vm140, %v1221, 0
  %1253 = vmatpush.bf16.msra.mxu0 0
  %1254 = vmatpush.bf16.msra.mxu0 0
  %1255 = vmatpush.bf16.msra.mxu0 0
  %1256 = vmatpush.bf16.msra.mxu0 0
  %1257 = vmatpush.bf16.msra.mxu0 0
  %1258 = vmatpush.bf16.msra.mxu0 0
  %1259 = vmatpush.bf16.msra.mxu0 %v1241
  %1260 = vmatpush.bf16.msra.mxu0 %v1240
  %1261 = vmatmul.bf16.gmra.mxu0 %v1245
  %v1262 = vpop.f32.mrf.mxu0
  %v1263 = vadd.f32 %v1230, %v1262
  %v1264 = vpop.f32.mrf.mxu0
  %v1265 = vadd.f32 %v1230, %v1264
  %1266 = vmatmul.bf16.gmra.mxu0 %v1248
  %v1267 = vpop.f32.mrf.mxu0
  %v1268 = vadd.f32 %v1230, %v1267
  %v1269 = vpop.f32.mrf.mxu0
  %v1270 = vadd.f32 %v1230, %v1269
  %1271 = vmatmul.bf16.gmra.mxu0 %v1251
  %v1272 = vpop.f32.mrf.mxu0
  %v1273 = vadd.f32 %v1230, %v1272
  %v1274 = vpop.f32.mrf.mxu0
  %1275 = vdwg.mxu0
  %s1276 = scalar_lea.vmem %s8, 16
  %v1277 = vld [vmem:[%s1276] sm:$0xf]
  %v1278 = vld [vmem:[%s1276 + $0x4] sm:$0xf]
  %v1279 = vld [vmem:[%s1276 + $0x8] sm:$0xf]
  %v1280 = vld [vmem:[%s1276 + $0xc] sm:$0xf]
  %v1281 = vpack.c.bf16 %v1265, %v1263
  %v1282 = vpack.c.bf16 %v1270, %v1268
  %v1283 = vpack.c.bf16 %v1273, %v1273
  %1287 = vrot.lane.b32.xlu0 %v1281, 96
  %v1288 = vpop.permute.xlu0 %1287
  %1289 = vrot.lane.b32.xlu0 %v1282, 96
  %v1290 = vpop.permute.xlu0 %1289
  %1291 = vrot.lane.b32.xlu0 %v1283, 96
  %v1292 = vpop.permute.xlu0 %1291
  %v1294 = vsel %vm346, %v1281, 0
  %v1297 = vsel %vm346, %v1282, 0
  %v1300 = vsel %vm346, %v1283, 0
  %v1303 = vsel %vm346, %v1288, 0
  %v1306 = vsel %vm346, %v1290, 0
  %v1309 = vsel %vm346, %v1292, 0
  %1311 = vmatpush.bf16.xpose.msra.mxu0 0
  %1312 = vmatpush.bf16.xpose.msra.mxu0 0
  %1313 = vmatpush.bf16.xpose.msra.mxu0 0
  %1314 = vmatpush.bf16.xpose.msra.mxu0 0
  %1315 = vmatpush.bf16.xpose.msra.mxu0 0
  %1316 = vmatpush.bf16.xpose.msra.mxu0 %v1309
  %1317 = vmatpush.bf16.xpose.msra.mxu0 %v1306
  %1318 = vmatpush.bf16.xpose.msra.mxu0 %v1303
  %1319 = vmatmul.bf16.gmra.mxu0 %v1294
  %v1320 = vpop.f32.mrf.mxu0
  %v1321 = vadd.f32 0.0, %v1320
  %v1322 = vpop.f32.mrf.mxu0
  %v1323 = vadd.f32 0.0, %v1322
  %1324 = vmatmul.bf16.gmra.mxu0 %v1297
  %v1325 = vpop.f32.mrf.mxu0
  %v1326 = vadd.f32 0.0, %v1325
  %v1327 = vpop.f32.mrf.mxu0
  %v1328 = vadd.f32 0.0, %v1327
  %1329 = vmatmul.bf16.gmra.mxu0 %v1300
  %v1330 = vpop.f32.mrf.mxu0
  %v1331 = vadd.f32 0.0, %v1330
  %v1332 = vpop.f32.mrf.mxu0
  %1333 = vdwg.mxu0
  %v1334 = vmul.f32 %v1321, 0.25
  %v1335 = vmul.f32 %v1323, 0.25
  %v1336 = vmul.f32 %v1326, 0.25
  %v1337 = vmul.f32 %v1328, 0.25
  %v1338 = vmul.f32 %v1331, 0.25
  %v1339 = vadd.f32 %v1334, %v133
  %v1340 = vadd.f32 %v1335, %v134
  %v1341 = vadd.f32 %v1336, %v135
  %v1342 = vadd.f32 %v1337, %v136
  %v1343 = vadd.f32 %v1338, %v137
  %v1344 = vsel %vm398, %v1339, -inf
  %1345 = vmax.xlane.f32.xlu0 %v1344
  %v1346 = vpop.xlane.xlu0 %1345
  %v1347 = vsel %vm398, %v1340, -inf
  %1348 = vmax.xlane.f32.xlu0 %v1347
  %v1349 = vpop.xlane.xlu0 %1348
  %v1350 = vsel %vm398, %v1341, -inf
  %1351 = vmax.xlane.f32.xlu0 %v1350
  %v1352 = vpop.xlane.xlu0 %1351
  %v1353 = vsel %vm398, %v1342, -inf
  %1354 = vmax.xlane.f32.xlu0 %v1353
  %v1355 = vpop.xlane.xlu0 %1354
  %v1356 = vsel %vm411, %v1343, -inf
  %1357 = vmax.xlane.f32.xlu0 %v1356
  %v1358 = vpop.xlane.xlu0 %1357
  %v1359 = vsub.f32 %v1339, %v1346
  %v1360 = vsub.f32 %v1340, %v1349
  %v1361 = vsub.f32 %v1341, %v1352
  %v1362 = vsub.f32 %v1342, %v1355
  %v1363 = vsub.f32 %v1343, %v1358
  %v1364 = vmul.f32 %v1359, 1.442695
  %v1365 = vpow.pop %v1364
  %v1366 = vmul.f32 %v1360, 1.442695
  %v1367 = vpow.pop %v1366
  %v1368 = vmul.f32 %v1361, 1.442695
  %v1369 = vpow.pop %v1368
  %v1370 = vmul.f32 %v1362, 1.442695
  %v1371 = vpow.pop %v1370
  %v1372 = vmul.f32 %v1363, 1.442695
  %v1373 = vpow.pop %v1372
  %v1374 = vsel %vm398, %v1365, 0.0
  %1375 = vadd.xlane.f32.xlu0 %v1374
  %v1376 = vpop.xlane.xlu0 %1375
  %v1377 = vsel %vm398, %v1367, 0.0
  %1378 = vadd.xlane.f32.xlu0 %v1377
  %v1379 = vpop.xlane.xlu0 %1378
  %v1380 = vsel %vm398, %v1369, 0.0
  %1381 = vadd.xlane.f32.xlu0 %v1380
  %v1382 = vpop.xlane.xlu0 %1381
  %v1383 = vsel %vm398, %v1371, 0.0
  %1384 = vadd.xlane.f32.xlu0 %v1383
  %v1385 = vpop.xlane.xlu0 %1384
  %v1386 = vsel %vm411, %v1373, 0.0
  %1387 = vadd.xlane.f32.xlu0 %v1386
  %v1388 = vpop.xlane.xlu0 %1387
  %v1389 = vrcp.pop %v1376
  %v1390 = vrcp.pop %v1379
  %v1391 = vrcp.pop %v1382
  %v1392 = vrcp.pop %v1385
  %v1393 = vrcp.pop %v1388
  %v1394 = vmul.f32 %v1365, %v1389
  %v1395 = vmul.f32 %v1367, %v1390
  %v1396 = vmul.f32 %v1369, %v1391
  %v1397 = vmul.f32 %v1371, %v1392
  %v1398 = vmul.f32 %v1373, %v1393
  %v1399 = vpack.c.bf16 %v1395, %v1394
  %v1400 = vpack.c.bf16 %v1397, %v1396
  %v1401 = vpack.c.bf16 %v1398, %v1398
  %1402 = vrot.lane.b32.xlu0 %v1281, 64
  %v1403 = vpop.permute.xlu0 %1402
  %1404 = vrot.lane.b32.xlu0 %v1282, 64
  %v1405 = vpop.permute.xlu0 %1404
  %1406 = vrot.lane.b32.xlu0 %v1283, 64
  %v1407 = vpop.permute.xlu0 %1406
  %v1411 = vsel %vm398, %v1399, 0
  %v1414 = vsel %vm398, %v1400, 0
  %v1417 = vsel %vm398, %v1401, 0
  %v1420 = vsel %vm475, %v1407, 0
  %1422 = vmatpush.bf16.msra.mxu0 0
  %1423 = vmatpush.bf16.msra.mxu0 0
  %1424 = vmatpush.bf16.msra.mxu0 0
  %1425 = vmatpush.bf16.msra.mxu0 0
  %1426 = vmatpush.bf16.msra.mxu0 0
  %1427 = vmatpush.bf16.msra.mxu0 %v1420
  %1428 = vmatpush.bf16.msra.mxu0 %v1405
  %1429 = vmatpush.bf16.msra.mxu0 %v1403
  %1430 = vmatmul.bf16.gmra.mxu0 %v1411
  %v1431 = vpop.f32.mrf.mxu0
  %v1432 = vadd.f32 0.0, %v1431
  %v1433 = vpop.f32.mrf.mxu0
  %v1434 = vadd.f32 0.0, %v1433
  %1435 = vmatmul.bf16.gmra.mxu0 %v1414
  %v1436 = vpop.f32.mrf.mxu0
  %v1437 = vadd.f32 0.0, %v1436
  %v1438 = vpop.f32.mrf.mxu0
  %v1439 = vadd.f32 0.0, %v1438
  %1440 = vmatmul.bf16.gmra.mxu0 %v1417
  %v1441 = vpop.f32.mrf.mxu0
  %v1442 = vadd.f32 0.0, %v1441
  %v1443 = vpop.f32.mrf.mxu0
  %1444 = vdwg.mxu0
  %v1445 = vpack.c.bf16 %v1434, %v1432
  %v1446 = vpack.c.bf16 %v1439, %v1437
  %v1447 = vpack.c.bf16 %v1442, %v1442
  %1448 = vrot.lane.b32.xlu0 %v1281, 112
  %v1449 = vpop.permute.xlu0 %1448
  %1450 = vrot.lane.b32.xlu0 %v1282, 112
  %v1451 = vpop.permute.xlu0 %1450
  %1452 = vrot.lane.b32.xlu0 %v1283, 112
  %v1453 = vpop.permute.xlu0 %1452
  %1454 = vrot.lane.b32.xlu0 %v1281, 80
  %v1455 = vpop.permute.xlu0 %1454
  %1456 = vrot.lane.b32.xlu0 %v1282, 80
  %v1457 = vpop.permute.xlu0 %1456
  %1458 = vrot.lane.b32.xlu0 %v1283, 80
  %v1459 = vpop.permute.xlu0 %1458
  %v1461 = vsel %vm346, %v1449, 0
  %v1464 = vsel %vm346, %v1451, 0
  %v1467 = vsel %vm346, %v1453, 0
  %v1470 = vsel %vm346, %v1455, 0
  %v1473 = vsel %vm346, %v1457, 0
  %v1476 = vsel %vm346, %v1459, 0
  %1478 = vmatpush.bf16.xpose.msra.mxu0 0
  %1479 = vmatpush.bf16.xpose.msra.mxu0 0
  %1480 = vmatpush.bf16.xpose.msra.mxu0 0
  %1481 = vmatpush.bf16.xpose.msra.mxu0 0
  %1482 = vmatpush.bf16.xpose.msra.mxu0 0
  %1483 = vmatpush.bf16.xpose.msra.mxu0 %v1476
  %1484 = vmatpush.bf16.xpose.msra.mxu0 %v1473
  %1485 = vmatpush.bf16.xpose.msra.mxu0 %v1470
  %1486 = vmatmul.bf16.gmra.mxu0 %v1461
  %v1487 = vpop.f32.mrf.mxu0
  %v1488 = vadd.f32 0.0, %v1487
  %v1489 = vpop.f32.mrf.mxu0
  %v1490 = vadd.f32 0.0, %v1489
  %1491 = vmatmul.bf16.gmra.mxu0 %v1464
  %v1492 = vpop.f32.mrf.mxu0
  %v1493 = vadd.f32 0.0, %v1492
  %v1494 = vpop.f32.mrf.mxu0
  %v1495 = vadd.f32 0.0, %v1494
  %1496 = vmatmul.bf16.gmra.mxu0 %v1467
  %v1497 = vpop.f32.mrf.mxu0
  %v1498 = vadd.f32 0.0, %v1497
  %v1499 = vpop.f32.mrf.mxu0
  %1500 = vdwg.mxu0
  %v1501 = vmul.f32 %v1488, 0.25
  %v1502 = vmul.f32 %v1490, 0.25
  %v1503 = vmul.f32 %v1493, 0.25
  %v1504 = vmul.f32 %v1495, 0.25
  %v1505 = vmul.f32 %v1498, 0.25
  %v1506 = vadd.f32 %v1501, %v133
  %v1507 = vadd.f32 %v1502, %v134
  %v1508 = vadd.f32 %v1503, %v135
  %v1509 = vadd.f32 %v1504, %v136
  %v1510 = vadd.f32 %v1505, %v137
  %v1511 = vsel %vm398, %v1506, -inf
  %1512 = vmax.xlane.f32.xlu0 %v1511
  %v1513 = vpop.xlane.xlu0 %1512
  %v1514 = vsel %vm398, %v1507, -inf
  %1515 = vmax.xlane.f32.xlu0 %v1514
  %v1516 = vpop.xlane.xlu0 %1515
  %v1517 = vsel %vm398, %v1508, -inf
  %1518 = vmax.xlane.f32.xlu0 %v1517
  %v1519 = vpop.xlane.xlu0 %1518
  %v1520 = vsel %vm398, %v1509, -inf
  %1521 = vmax.xlane.f32.xlu0 %v1520
  %v1522 = vpop.xlane.xlu0 %1521
  %v1523 = vsel %vm411, %v1510, -inf
  %1524 = vmax.xlane.f32.xlu0 %v1523
  %v1525 = vpop.xlane.xlu0 %1524
  %v1526 = vsub.f32 %v1506, %v1513
  %v1527 = vsub.f32 %v1507, %v1516
  %v1528 = vsub.f32 %v1508, %v1519
  %v1529 = vsub.f32 %v1509, %v1522
  %v1530 = vsub.f32 %v1510, %v1525
  %v1531 = vmul.f32 %v1526, 1.442695
  %v1532 = vpow.pop %v1531
  %v1533 = vmul.f32 %v1527, 1.442695
  %v1534 = vpow.pop %v1533
  %v1535 = vmul.f32 %v1528, 1.442695
  %v1536 = vpow.pop %v1535
  %v1537 = vmul.f32 %v1529, 1.442695
  %v1538 = vpow.pop %v1537
  %v1539 = vmul.f32 %v1530, 1.442695
  %v1540 = vpow.pop %v1539
  %v1541 = vsel %vm398, %v1532, 0.0
  %1542 = vadd.xlane.f32.xlu0 %v1541
  %v1543 = vpop.xlane.xlu0 %1542
  %v1544 = vsel %vm398, %v1534, 0.0
  %1545 = vadd.xlane.f32.xlu0 %v1544
  %v1546 = vpop.xlane.xlu0 %1545
  %v1547 = vsel %vm398, %v1536, 0.0
  %1548 = vadd.xlane.f32.xlu0 %v1547
  %v1549 = vpop.xlane.xlu0 %1548
  %v1550 = vsel %vm398, %v1538, 0.0
  %1551 = vadd.xlane.f32.xlu0 %v1550
  %v1552 = vpop.xlane.xlu0 %1551
  %v1553 = vsel %vm411, %v1540, 0.0
  %1554 = vadd.xlane.f32.xlu0 %v1553
  %v1555 = vpop.xlane.xlu0 %1554
  %v1556 = vrcp.pop %v1543
  %v1557 = vrcp.pop %v1546
  %v1558 = vrcp.pop %v1549
  %v1559 = vrcp.pop %v1552
  %v1560 = vrcp.pop %v1555
  %v1561 = vmul.f32 %v1532, %v1556
  %v1562 = vmul.f32 %v1534, %v1557
  %v1563 = vmul.f32 %v1536, %v1558
  %v1564 = vmul.f32 %v1538, %v1559
  %v1565 = vmul.f32 %v1540, %v1560
  %v1566 = vpack.c.bf16 %v1562, %v1561
  %v1567 = vpack.c.bf16 %v1564, %v1563
  %v1568 = vpack.c.bf16 %v1565, %v1565
  %1569 = vrot.lane.b32.xlu0 %v1281, 48
  %v1570 = vpop.permute.xlu0 %1569
  %1571 = vrot.lane.b32.xlu0 %v1282, 48
  %v1572 = vpop.permute.xlu0 %1571
  %1573 = vrot.lane.b32.xlu0 %v1283, 48
  %v1574 = vpop.permute.xlu0 %1573
  %v1578 = vsel %vm398, %v1566, 0
  %v1581 = vsel %vm398, %v1567, 0
  %v1584 = vsel %vm398, %v1568, 0
  %v1587 = vsel %vm475, %v1574, 0
  %1589 = vmatpush.bf16.msra.mxu0 0
  %1590 = vmatpush.bf16.msra.mxu0 0
  %1591 = vmatpush.bf16.msra.mxu0 0
  %1592 = vmatpush.bf16.msra.mxu0 0
  %1593 = vmatpush.bf16.msra.mxu0 0
  %1594 = vmatpush.bf16.msra.mxu0 %v1587
  %1595 = vmatpush.bf16.msra.mxu0 %v1572
  %1596 = vmatpush.bf16.msra.mxu0 %v1570
  %1597 = vmatmul.bf16.gmra.mxu0 %v1578
  %v1598 = vpop.f32.mrf.mxu0
  %v1599 = vadd.f32 0.0, %v1598
  %v1600 = vpop.f32.mrf.mxu0
  %v1601 = vadd.f32 0.0, %v1600
  %1602 = vmatmul.bf16.gmra.mxu0 %v1581
  %v1603 = vpop.f32.mrf.mxu0
  %v1604 = vadd.f32 0.0, %v1603
  %v1605 = vpop.f32.mrf.mxu0
  %v1606 = vadd.f32 0.0, %v1605
  %1607 = vmatmul.bf16.gmra.mxu0 %v1584
  %v1608 = vpop.f32.mrf.mxu0
  %v1609 = vadd.f32 0.0, %v1608
  %v1610 = vpop.f32.mrf.mxu0
  %1611 = vdwg.mxu0
  %v1612 = vpack.c.bf16 %v1601, %v1599
  %v1613 = vpack.c.bf16 %v1606, %v1604
  %v1614 = vpack.c.bf16 %v1609, %v1609
  %v1617 = vunpack.c.l.b16 %v1279
  %v1618 = vunpack.c.l.b16 %v1280
  %v1619 = vpack.c.b16 %v1618, %v1617
  %v1622 = vsel %vm346, %v1612, 0
  %v1625 = vsel %vm346, %v1613, 0
  %v1628 = vsel %vm346, %v1614, 0
  %1630 = vmatpush.bf16.msra.mxu0 0
  %1631 = vmatpush.bf16.msra.mxu0 0
  %1632 = vmatpush.bf16.msra.mxu0 0
  %1633 = vmatpush.bf16.msra.mxu0 0
  %1634 = vmatpush.bf16.msra.mxu0 0
  %1635 = vmatpush.bf16.msra.mxu0 0
  %1636 = vmatpush.bf16.msra.mxu0 0
  %1637 = vmatpush.bf16.msra.mxu0 %v1619
  %1638 = vmatmul.bf16.gmra.mxu0 %v1622
  %v1639 = vpop.f32.mrf.mxu0
  %v1640 = vadd.f32 0.0, %v1639
  %v1641 = vpop.f32.mrf.mxu0
  %v1642 = vadd.f32 0.0, %v1641
  %1643 = vmatmul.bf16.gmra.mxu0 %v1625
  %v1644 = vpop.f32.mrf.mxu0
  %v1645 = vadd.f32 0.0, %v1644
  %v1646 = vpop.f32.mrf.mxu0
  %v1647 = vadd.f32 0.0, %v1646
  %1648 = vmatmul.bf16.gmra.mxu0 %v1628
  %v1649 = vpop.f32.mrf.mxu0
  %v1650 = vadd.f32 0.0, %v1649
  %v1651 = vpop.f32.mrf.mxu0
  %1652 = vdwg.mxu0
  %v1655 = vunpack.c.l.b16 %v1277
  %v1656 = vunpack.c.l.b16 %v1278
  %v1657 = vpack.c.b16 %v1656, %v1655
  %v1660 = vsel %vm346, %v1445, 0
  %v1663 = vsel %vm346, %v1446, 0
  %v1666 = vsel %vm346, %v1447, 0
  %1668 = vmatpush.bf16.msra.mxu0 0
  %1669 = vmatpush.bf16.msra.mxu0 0
  %1670 = vmatpush.bf16.msra.mxu0 0
  %1671 = vmatpush.bf16.msra.mxu0 0
  %1672 = vmatpush.bf16.msra.mxu0 0
  %1673 = vmatpush.bf16.msra.mxu0 0
  %1674 = vmatpush.bf16.msra.mxu0 0
  %1675 = vmatpush.bf16.msra.mxu0 %v1657
  %1676 = vmatmul.bf16.gmra.mxu0 %v1660
  %v1677 = vpop.f32.mrf.mxu0
  %v1678 = vadd.f32 %v1640, %v1677
  %v1679 = vpop.f32.mrf.mxu0
  %v1680 = vadd.f32 %v1642, %v1679
  %1681 = vmatmul.bf16.gmra.mxu0 %v1663
  %v1682 = vpop.f32.mrf.mxu0
  %v1683 = vadd.f32 %v1645, %v1682
  %v1684 = vpop.f32.mrf.mxu0
  %v1685 = vadd.f32 %v1647, %v1684
  %1686 = vmatmul.bf16.gmra.mxu0 %v1666
  %v1687 = vpop.f32.mrf.mxu0
  %v1688 = vadd.f32 %v1650, %v1687
  %v1689 = vpop.f32.mrf.mxu0
  %1690 = vdwg.mxu0
  %v1691 = vadd.f32 %v1084, %v1678
  %v1692 = vadd.f32 %v1085, %v1680
  %v1693 = vadd.f32 %v1086, %v1683
  %v1694 = vadd.f32 %v1087, %v1685
  %v1695 = vadd.f32 %v1088, %v1688
  %s1696 = scalar_lea.vmem %s9, 1
  %v1697 = vld [vmem:[%s1696] sm:$0x1]
  %v1699 = vperm.slane %v1697, 0
  %v1701 = vadd.f32 %v1691, %v1699
  %v1702 = vadd.f32 %v1692, %v1699
  %v1703 = vadd.f32 %v1693, %v1699
  %v1704 = vadd.f32 %v1694, %v1699
  %v1705 = vadd.f32 %v1695, %v1699
  %s1706 = scalar_lea.vmem %s10, 1
  %v1707 = vld [vmem:[%s1706] sm:$0x1]
  %s1708 = scalar_lea.vmem %s11, 1
  %v1709 = vld [vmem:[%s1708] sm:$0x1]
  %v1710 = vsel %vm140, %v1701, 0.0
  %1711 = vadd.xlane.f32.xlu0 %v1710
  %v1712 = vpop.xlane.xlu0 %1711
  %v1713 = vsel %vm140, %v1702, 0.0
  %1714 = vadd.xlane.f32.xlu0 %v1713
  %v1715 = vpop.xlane.xlu0 %1714
  %v1716 = vsel %vm140, %v1703, 0.0
  %1717 = vadd.xlane.f32.xlu0 %v1716
  %v1718 = vpop.xlane.xlu0 %1717
  %v1719 = vsel %vm140, %v1704, 0.0
  %1720 = vadd.xlane.f32.xlu0 %v1719
  %v1721 = vpop.xlane.xlu0 %1720
  %v1722 = vsel %vm153, %v1705, 0.0
  %1723 = vadd.xlane.f32.xlu0 %v1722
  %v1724 = vpop.xlane.xlu0 %1723
  %v1725 = vmul.f32 %v1712, %v163
  %v1726 = vmul.f32 %v1715, %v163
  %v1727 = vmul.f32 %v1718, %v163
  %v1728 = vmul.f32 %v1721, %v163
  %v1729 = vmul.f32 %v1724, %v163
  %v1730 = vsub.f32 %v1701, %v1725
  %v1731 = vsub.f32 %v1702, %v1726
  %v1732 = vsub.f32 %v1703, %v1727
  %v1733 = vsub.f32 %v1704, %v1728
  %v1734 = vsub.f32 %v1705, %v1729
  %v1735 = vmul.f32 %v1730, %v1730
  %v1736 = vmul.f32 %v1731, %v1731
  %v1737 = vmul.f32 %v1732, %v1732
  %v1738 = vmul.f32 %v1733, %v1733
  %v1739 = vmul.f32 %v1734, %v1734
  %v1740 = vsel %vm140, %v1735, 0.0
  %1741 = vadd.xlane.f32.xlu0 %v1740
  %v1742 = vpop.xlane.xlu0 %1741
  %v1743 = vsel %vm140, %v1736, 0.0
  %1744 = vadd.xlane.f32.xlu0 %v1743
  %v1745 = vpop.xlane.xlu0 %1744
  %v1746 = vsel %vm140, %v1737, 0.0
  %1747 = vadd.xlane.f32.xlu0 %v1746
  %v1748 = vpop.xlane.xlu0 %1747
  %v1749 = vsel %vm140, %v1738, 0.0
  %1750 = vadd.xlane.f32.xlu0 %v1749
  %v1751 = vpop.xlane.xlu0 %1750
  %v1752 = vsel %vm153, %v1739, 0.0
  %1753 = vadd.xlane.f32.xlu0 %v1752
  %v1754 = vpop.xlane.xlu0 %1753
  %v1755 = vmul.f32 %v1742, %v163
  %v1756 = vmul.f32 %v1745, %v163
  %v1757 = vmul.f32 %v1748, %v163
  %v1758 = vmul.f32 %v1751, %v163
  %v1759 = vmul.f32 %v1754, %v163
  %v1760 = vadd.f32 %v1755, 1e-05
  %v1761 = vadd.f32 %v1756, 1e-05
  %v1762 = vadd.f32 %v1757, 1e-05
  %v1763 = vadd.f32 %v1758, 1e-05
  %v1764 = vadd.f32 %v1759, 1e-05
  %v1765 = vrsqrt.pop %v1760
  %v1766 = vmul.f32 %v1765, %v1760
  %v1767 = vmul.f32 %v1766, %v1765
  %v1768 = vmul.f32 0.5, %v1767
  %v1769 = vsub.f32 1.5, %v1768
  %v1770 = vmul.f32 %v1765, %v1769
  %vm1771 = vweird.f32 %v1760
  %vm1772 = vweird.f32 %v1765
  %vm1773 = vmor %vm1771, %vm1772
  %v1774 = vsel %vm1773, %v1765, %v1770
  %v1775 = vrsqrt.pop %v1761
  %v1776 = vmul.f32 %v1775, %v1761
  %v1777 = vmul.f32 %v1776, %v1775
  %v1778 = vmul.f32 0.5, %v1777
  %v1779 = vsub.f32 1.5, %v1778
  %v1780 = vmul.f32 %v1775, %v1779
  %vm1781 = vweird.f32 %v1761
  %vm1782 = vweird.f32 %v1775
  %vm1783 = vmor %vm1781, %vm1782
  %v1784 = vsel %vm1783, %v1775, %v1780
  %v1785 = vrsqrt.pop %v1762
  %v1786 = vmul.f32 %v1785, %v1762
  %v1787 = vmul.f32 %v1786, %v1785
  %v1788 = vmul.f32 0.5, %v1787
  %v1789 = vsub.f32 1.5, %v1788
  %v1790 = vmul.f32 %v1785, %v1789
  %vm1791 = vweird.f32 %v1762
  %vm1792 = vweird.f32 %v1785
  %vm1793 = vmor %vm1791, %vm1792
  %v1794 = vsel %vm1793, %v1785, %v1790
  %v1795 = vrsqrt.pop %v1763
  %v1796 = vmul.f32 %v1795, %v1763
  %v1797 = vmul.f32 %v1796, %v1795
  %v1798 = vmul.f32 0.5, %v1797
  %v1799 = vsub.f32 1.5, %v1798
  %v1800 = vmul.f32 %v1795, %v1799
  %vm1801 = vweird.f32 %v1763
  %vm1802 = vweird.f32 %v1795
  %vm1803 = vmor %vm1801, %vm1802
  %v1804 = vsel %vm1803, %v1795, %v1800
  %v1805 = vrsqrt.pop %v1764
  %v1806 = vmul.f32 %v1805, %v1764
  %v1807 = vmul.f32 %v1806, %v1805
  %v1808 = vmul.f32 0.5, %v1807
  %v1809 = vsub.f32 1.5, %v1808
  %v1810 = vmul.f32 %v1805, %v1809
  %vm1811 = vweird.f32 %v1764
  %vm1812 = vweird.f32 %v1805
  %vm1813 = vmor %vm1811, %vm1812
  %v1814 = vsel %vm1813, %v1805, %v1810
  %v1815 = vmul.f32 %v1730, %v1774
  %v1816 = vmul.f32 %v1731, %v1784
  %v1817 = vmul.f32 %v1732, %v1794
  %v1818 = vmul.f32 %v1733, %v1804
  %v1819 = vmul.f32 %v1734, %v1814
  %v1821 = vperm.slane %v1707, 0
  %v1823 = vmul.f32 %v1815, %v1821
  %v1824 = vmul.f32 %v1816, %v1821
  %v1825 = vmul.f32 %v1817, %v1821
  %v1826 = vmul.f32 %v1818, %v1821
  %v1827 = vmul.f32 %v1819, %v1821
  %v1829 = vperm.slane %v1709, 0
  %v1831 = vadd.f32 %v1823, %v1829
  %v1832 = vadd.f32 %v1824, %v1829
  %v1833 = vadd.f32 %v1825, %v1829
  %v1834 = vadd.f32 %v1826, %v1829
  %v1835 = vadd.f32 %v1827, %v1829
  %v1836 = vpack.c.bf16 %v1832, %v1831
  %v1837 = vpack.c.bf16 %v1834, %v1833
  %v1838 = vpack.c.bf16 %v1835, %v1835
  %s1839 = scalar_lea.vmem %s12, 16
  %v1840 = vld [vmem:[%s1839] sm:$0xf]
  %v1841 = vld [vmem:[%s1839 + $0x4] sm:$0xf]
  %v1842 = vld [vmem:[%s1839 + $0x8] sm:$0xf]
  %v1843 = vld [vmem:[%s1839 + $0xc] sm:$0xf]
  %s1844 = scalar_lea.vmem %s13, 1
  %v1845 = vld [vmem:[%s1844] sm:$0x1]
  %v1847 = vperm.slane %v1845, 0
  %v1853 = vunpack.c.l.b16 %v1840
  %v1854 = vunpack.c.l.b16 %v1841
  %v1855 = vunpack.c.l.b16 %v1842
  %v1856 = vunpack.c.l.b16 %v1843
  %v1857 = vpack.c.b16 %v1854, %v1853
  %v1858 = vpack.c.b16 %v1856, %v1855
  %v1862 = vsel %vm140, %v1836, 0
  %v1865 = vsel %vm140, %v1837, 0
  %v1868 = vsel %vm140, %v1838, 0
  %1870 = vmatpush.bf16.msra.mxu0 0
  %1871 = vmatpush.bf16.msra.mxu0 0
  %1872 = vmatpush.bf16.msra.mxu0 0
  %1873 = vmatpush.bf16.msra.mxu0 0
  %1874 = vmatpush.bf16.msra.mxu0 0
  %1875 = vmatpush.bf16.msra.mxu0 0
  %1876 = vmatpush.bf16.msra.mxu0 %v1858
  %1877 = vmatpush.bf16.msra.mxu0 %v1857
  %1878 = vmatmul.bf16.gmra.mxu0 %v1862
  %v1879 = vpop.f32.mrf.mxu0
  %v1880 = vadd.f32 %v1847, %v1879
  %v1881 = vpop.f32.mrf.mxu0
  %v1882 = vadd.f32 %v1847, %v1881
  %1883 = vmatmul.bf16.gmra.mxu0 %v1865
  %v1884 = vpop.f32.mrf.mxu0
  %v1885 = vadd.f32 %v1847, %v1884
  %v1886 = vpop.f32.mrf.mxu0
  %v1887 = vadd.f32 %v1847, %v1886
  %1888 = vmatmul.bf16.gmra.mxu0 %v1868
  %v1889 = vpop.f32.mrf.mxu0
  %v1890 = vadd.f32 %v1847, %v1889
  %v1891 = vpop.f32.mrf.mxu0
  %1892 = vdwg.mxu0
  %v1893 = vmul.f32 %v1880, 0.5
  %v1894 = vmul.f32 %v1882, 0.5
  %v1895 = vmul.f32 %v1885, 0.5
  %v1896 = vmul.f32 %v1887, 0.5
  %v1897 = vmul.f32 %v1890, 0.5
  %v1898 = vmul.f32 %v1880, 0.044715
  %v1899 = vmul.f32 %v1882, 0.044715
  %v1900 = vmul.f32 %v1885, 0.044715
  %v1901 = vmul.f32 %v1887, 0.044715
  %v1902 = vmul.f32 %v1890, 0.044715
  %v1903 = vmul.f32 %v1898, %v1880
  %v1904 = vmul.f32 %v1899, %v1882
  %v1905 = vmul.f32 %v1900, %v1885
  %v1906 = vmul.f32 %v1901, %v1887
  %v1907 = vmul.f32 %v1902, %v1890
  %v1908 = vmul.f32 %v1903, %v1880
  %v1909 = vmul.f32 %v1904, %v1882
  %v1910 = vmul.f32 %v1905, %v1885
  %v1911 = vmul.f32 %v1906, %v1887
  %v1912 = vmul.f32 %v1907, %v1890
  %v1913 = vadd.f32 %v1880, %v1908
  %v1914 = vadd.f32 %v1882, %v1909
  %v1915 = vadd.f32 %v1885, %v1910
  %v1916 = vadd.f32 %v1887, %v1911
  %v1917 = vadd.f32 %v1890, %v1912
  %v1918 = vmul.f32 %v1913, 0.7978846
  %v1919 = vmul.f32 %v1914, 0.7978846
  %v1920 = vmul.f32 %v1915, 0.7978846
  %v1921 = vmul.f32 %v1916, 0.7978846
  %v1922 = vmul.f32 %v1917, 0.7978846
  %v1923 = vtanh.pop %v1918
  %v1924 = vtanh.pop %v1919
  %v1925 = vtanh.pop %v1920
  %v1926 = vtanh.pop %v1921
  %v1927 = vtanh.pop %v1922
  %v1928 = vadd.f32 %v1923, 1.0
  %v1929 = vadd.f32 %v1924, 1.0
  %v1930 = vadd.f32 %v1925, 1.0
  %v1931 = vadd.f32 %v1926, 1.0
  %v1932 = vadd.f32 %v1927, 1.0
  %v1933 = vmul.f32 %v1893, %v1928
  %v1934 = vmul.f32 %v1894, %v1929
  %v1935 = vmul.f32 %v1895, %v1930
  %v1936 = vmul.f32 %v1896, %v1931
  %v1937 = vmul.f32 %v1897, %v1932
  %v1938 = vpack.c.bf16 %v1934, %v1933
  %v1939 = vpack.c.bf16 %v1936, %v1935
  %v1940 = vpack.c.bf16 %v1937, %v1937
  %s1941 = scalar_lea.vmem %s14, 64
  %v1942 = vld [vmem:[%s1941] sm:$0xf]
  %v1943 = vld [vmem:[%s1941 + $0x4] sm:$0xf]
  %v1944 = vld [vmem:[%s1941 + $0x8] sm:$0xf]
  %v1945 = vld [vmem:[%s1941 + $0xc] sm:$0xf]
  %v1946 = vld [vmem:[%s1941 + $0x10] sm:$0xf]
  %v1947 = vld [vmem:[%s1941 + $0x14] sm:$0xf]
  %v1948 = vld [vmem:[%s1941 + $0x18] sm:$0xf]
  %v1949 = vld [vmem:[%s1941 + $0x1c] sm:$0xf]
  %v1950 = vld [vmem:[%s1941 + $0x20] sm:$0xf]
  %v1951 = vld [vmem:[%s1941 + $0x24] sm:$0xf]
  %v1952 = vld [vmem:[%s1941 + $0x28] sm:$0xf]
  %v1953 = vld [vmem:[%s1941 + $0x2c] sm:$0xf]
  %v1954 = vld [vmem:[%s1941 + $0x30] sm:$0xf]
  %v1955 = vld [vmem:[%s1941 + $0x34] sm:$0xf]
  %v1956 = vld [vmem:[%s1941 + $0x38] sm:$0xf]
  %v1957 = vld [vmem:[%s1941 + $0x3c] sm:$0xf]
  %s1958 = scalar_lea.vmem %s15, 1
  %v1959 = vld [vmem:[%s1958] sm:$0x1]
  %v1961 = vperm.slane %v1959, 0
  %v1979 = vunpack.c.l.b16 %v1942
  %v1980 = vunpack.c.l.b16 %v1943
  %v1981 = vunpack.c.l.b16 %v1944
  %v1982 = vunpack.c.l.b16 %v1945
  %v1983 = vunpack.c.l.b16 %v1946
  %v1984 = vunpack.c.l.b16 %v1947
  %v1985 = vunpack.c.l.b16 %v1948
  %v1986 = vunpack.c.l.b16 %v1949
  %v1987 = vunpack.c.l.b16 %v1950
  %v1988 = vunpack.c.l.b16 %v1951
  %v1989 = vunpack.c.l.b16 %v1952
  %v1990 = vunpack.c.l.b16 %v1953
  %v1991 = vunpack.c.l.b16 %v1954
  %v1992 = vunpack.c.l.b16 %v1955
  %v1993 = vunpack.c.l.b16 %v1956
  %v1994 = vunpack.c.l.b16 %v1957
  %v1995 = vpack.c.b16 %v1980, %v1979
  %v1996 = vpack.c.b16 %v1982, %v1981
  %v1997 = vpack.c.b16 %v1984, %v1983
  %v1998 = vpack.c.b16 %v1986, %v1985
  %v1999 = vpack.c.b16 %v1988, %v1987
  %v2000 = vpack.c.b16 %v1990, %v1989
  %v2001 = vpack.c.b16 %v1992, %v1991
  %v2002 = vpack.c.b16 %v1994, %v1993
  %2011 = vmatpush.bf16.msra.mxu0 %v2002
  %2012 = vmatpush.bf16.msra.mxu0 %v2001
  %2013 = vmatpush.bf16.msra.mxu0 %v2000
  %2014 = vmatpush.bf16.msra.mxu0 %v1999
  %2015 = vmatpush.bf16.msra.mxu0 %v1998
  %2016 = vmatpush.bf16.msra.mxu0 %v1997
  %2017 = vmatpush.bf16.msra.mxu0 %v1996
  %2018 = vmatpush.bf16.msra.mxu0 %v1995
  %2019 = vmatmul.bf16.gmra.mxu0 %v1938
  %v2020 = vpop.f32.mrf.mxu0
  %v2021 = vadd.f32 %v1961, %v2020
  %v2022 = vpop.f32.mrf.mxu0
  %v2023 = vadd.f32 %v1961, %v2022
  %2024 = vmatmul.bf16.gmra.mxu0 %v1939
  %v2025 = vpop.f32.mrf.mxu0
  %v2026 = vadd.f32 %v1961, %v2025
  %v2027 = vpop.f32.mrf.mxu0
  %v2028 = vadd.f32 %v1961, %v2027
  %2029 = vmatmul.bf16.gmra.mxu0 %v1940
  %v2030 = vpop.f32.mrf.mxu0
  %v2031 = vadd.f32 %v1961, %v2030
  %v2032 = vpop.f32.mrf.mxu0
  %2033 = vdwg.mxu0
  %v2034 = vadd.f32 %v1701, %v2021
  %v2035 = vadd.f32 %v1702, %v2023
  %v2036 = vadd.f32 %v1703, %v2026
  %v2037 = vadd.f32 %v1704, %v2028
  %v2038 = vadd.f32 %v1705, %v2031
  %v2039 = vld [vmem:[%s16] sm:$0x1]
  %v2040 = vld [vmem:[%s17] sm:$0x1]
  %v2041 = vsel %vm140, %v2034, 0.0
  %2042 = vadd.xlane.f32.xlu0 %v2041
  %v2043 = vpop.xlane.xlu0 %2042
  %v2044 = vsel %vm140, %v2035, 0.0
  %2045 = vadd.xlane.f32.xlu0 %v2044
  %v2046 = vpop.xlane.xlu0 %2045
  %v2047 = vsel %vm140, %v2036, 0.0
  %2048 = vadd.xlane.f32.xlu0 %v2047
  %v2049 = vpop.xlane.xlu0 %2048
  %v2050 = vsel %vm140, %v2037, 0.0
  %2051 = vadd.xlane.f32.xlu0 %v2050
  %v2052 = vpop.xlane.xlu0 %2051
  %v2053 = vsel %vm153, %v2038, 0.0
  %2054 = vadd.xlane.f32.xlu0 %v2053
  %v2055 = vpop.xlane.xlu0 %2054
  %v2056 = vmul.f32 %v2043, %v163
  %v2057 = vmul.f32 %v2046, %v163
  %v2058 = vmul.f32 %v2049, %v163
  %v2059 = vmul.f32 %v2052, %v163
  %v2060 = vmul.f32 %v2055, %v163
  %v2061 = vsub.f32 %v2034, %v2056
  %v2062 = vsub.f32 %v2035, %v2057
  %v2063 = vsub.f32 %v2036, %v2058
  %v2064 = vsub.f32 %v2037, %v2059
  %v2065 = vsub.f32 %v2038, %v2060
  %v2066 = vmul.f32 %v2061, %v2061
  %v2067 = vmul.f32 %v2062, %v2062
  %v2068 = vmul.f32 %v2063, %v2063
  %v2069 = vmul.f32 %v2064, %v2064
  %v2070 = vmul.f32 %v2065, %v2065
  %v2071 = vsel %vm140, %v2066, 0.0
  %2072 = vadd.xlane.f32.xlu0 %v2071
  %v2073 = vpop.xlane.xlu0 %2072
  %v2074 = vsel %vm140, %v2067, 0.0
  %2075 = vadd.xlane.f32.xlu0 %v2074
  %v2076 = vpop.xlane.xlu0 %2075
  %v2077 = vsel %vm140, %v2068, 0.0
  %2078 = vadd.xlane.f32.xlu0 %v2077
  %v2079 = vpop.xlane.xlu0 %2078
  %v2080 = vsel %vm140, %v2069, 0.0
  %2081 = vadd.xlane.f32.xlu0 %v2080
  %v2082 = vpop.xlane.xlu0 %2081
  %v2083 = vsel %vm153, %v2070, 0.0
  %2084 = vadd.xlane.f32.xlu0 %v2083
  %v2085 = vpop.xlane.xlu0 %2084
  %v2086 = vmul.f32 %v2073, %v163
  %v2087 = vmul.f32 %v2076, %v163
  %v2088 = vmul.f32 %v2079, %v163
  %v2089 = vmul.f32 %v2082, %v163
  %v2090 = vmul.f32 %v2085, %v163
  %v2091 = vadd.f32 %v2086, 1e-05
  %v2092 = vadd.f32 %v2087, 1e-05
  %v2093 = vadd.f32 %v2088, 1e-05
  %v2094 = vadd.f32 %v2089, 1e-05
  %v2095 = vadd.f32 %v2090, 1e-05
  %v2096 = vrsqrt.pop %v2091
  %v2097 = vmul.f32 %v2096, %v2091
  %v2098 = vmul.f32 %v2097, %v2096
  %v2099 = vmul.f32 0.5, %v2098
  %v2100 = vsub.f32 1.5, %v2099
  %v2101 = vmul.f32 %v2096, %v2100
  %vm2102 = vweird.f32 %v2091
  %vm2103 = vweird.f32 %v2096
  %vm2104 = vmor %vm2102, %vm2103
  %v2105 = vsel %vm2104, %v2096, %v2101
  %v2106 = vrsqrt.pop %v2092
  %v2107 = vmul.f32 %v2106, %v2092
  %v2108 = vmul.f32 %v2107, %v2106
  %v2109 = vmul.f32 0.5, %v2108
  %v2110 = vsub.f32 1.5, %v2109
  %v2111 = vmul.f32 %v2106, %v2110
  %vm2112 = vweird.f32 %v2092
  %vm2113 = vweird.f32 %v2106
  %vm2114 = vmor %vm2112, %vm2113
  %v2115 = vsel %vm2114, %v2106, %v2111
  %v2116 = vrsqrt.pop %v2093
  %v2117 = vmul.f32 %v2116, %v2093
  %v2118 = vmul.f32 %v2117, %v2116
  %v2119 = vmul.f32 0.5, %v2118
  %v2120 = vsub.f32 1.5, %v2119
  %v2121 = vmul.f32 %v2116, %v2120
  %vm2122 = vweird.f32 %v2093
  %vm2123 = vweird.f32 %v2116
  %vm2124 = vmor %vm2122, %vm2123
  %v2125 = vsel %vm2124, %v2116, %v2121
  %v2126 = vrsqrt.pop %v2094
  %v2127 = vmul.f32 %v2126, %v2094
  %v2128 = vmul.f32 %v2127, %v2126
  %v2129 = vmul.f32 0.5, %v2128
  %v2130 = vsub.f32 1.5, %v2129
  %v2131 = vmul.f32 %v2126, %v2130
  %vm2132 = vweird.f32 %v2094
  %vm2133 = vweird.f32 %v2126
  %vm2134 = vmor %vm2132, %vm2133
  %v2135 = vsel %vm2134, %v2126, %v2131
  %v2136 = vrsqrt.pop %v2095
  %v2137 = vmul.f32 %v2136, %v2095
  %v2138 = vmul.f32 %v2137, %v2136
  %v2139 = vmul.f32 0.5, %v2138
  %v2140 = vsub.f32 1.5, %v2139
  %v2141 = vmul.f32 %v2136, %v2140
  %vm2142 = vweird.f32 %v2095
  %vm2143 = vweird.f32 %v2136
  %vm2144 = vmor %vm2142, %vm2143
  %v2145 = vsel %vm2144, %v2136, %v2141
  %v2146 = vmul.f32 %v2061, %v2105
  %v2147 = vmul.f32 %v2062, %v2115
  %v2148 = vmul.f32 %v2063, %v2125
  %v2149 = vmul.f32 %v2064, %v2135
  %v2150 = vmul.f32 %v2065, %v2145
  %v2152 = vperm.slane %v2039, 0
  %v2154 = vmul.f32 %v2146, %v2152
  %v2155 = vmul.f32 %v2147, %v2152
  %v2156 = vmul.f32 %v2148, %v2152
  %v2157 = vmul.f32 %v2149, %v2152
  %v2158 = vmul.f32 %v2150, %v2152
  %v2160 = vperm.slane %v2040, 0
  %v2162 = vadd.f32 %v2154, %v2160
  %v2163 = vadd.f32 %v2155, %v2160
  %v2164 = vadd.f32 %v2156, %v2160
  %v2165 = vadd.f32 %v2157, %v2160
  %v2166 = vadd.f32 %v2158, %v2160
  %v2167 = vld [vmem:[%s18] sm:$0xf]
  %v2168 = vld [vmem:[%s19] sm:$0xf]
  %v2169 = vld [vmem:[%s20] sm:$0xff]
  %v2170 = vld [vmem:[%s20 + $0x8] sm:$0xff]
  %v2171 = vld [vmem:[%s20 + $0x10] sm:$0xff]
  %v2172 = vld [vmem:[%s20 + $0x18] sm:$0xff]
  %2174 = vset.pattern.permute.xlu0 0
  %2175 = vperm.xlu0 %2174, %v2168
  %v2176 = vpop.permute.xlu0 %2175
  %vm2181 = vcmask 1046528
  %v2182 = vrot.slane %v2162, 1
  %v2183 = vrot.slane %v2163, 1
  %v2184 = vsel %vm2181, %v2182, %v2183
  %v2185 = vrot.slane %v2164, 1
  %v2186 = vsel %vm2181, %v2183, %v2185
  %v2188 = vsel %vm140, %v2167, 0
  %v2190 = vsel %vm140, %v2184, 0
  %v2192 = vsel %vm140, %v2186, 0
  %2194 = vmatpush.xpose.msra.mxu0 0.0
  %2195 = vmatpush.xpose.msra.mxu0 0.0
  %2196 = vmatpush.xpose.msra.mxu0 0.0
  %2197 = vmatpush.xpose.msra.mxu0 0.0
  %2198 = vmatpush.xpose.msra.mxu0 0.0
  %2199 = vmatpush.xpose.msra.mxu0 0.0
  %2200 = vmatpush.xpose.msra.mxu0 0.0
  %2201 = vmatpush.xpose.msra.mxu0 0.0
  %2202 = vmatpush.xpose.msra.mxu0 0.0
  %2203 = vmatpush.xpose.msra.mxu0 0.0
  %2204 = vmatpush.xpose.msra.mxu0 0.0
  %2205 = vmatpush.xpose.msra.mxu0 0.0
  %2206 = vmatpush.xpose.msra.mxu0 0.0
  %2207 = vmatpush.xpose.msra.mxu0 0.0
  %2208 = vmatpush.xpose.msra.mxu0 %v2192
  %2209 = vmatpush.xpose.msra.mxu0 %v2190
  %2210 = vmatmul.f32.gmra.mxu0 %v2188
  %v2211 = vpop.f32.mrf.mxu0
  %v2212 = vadd.f32 %v2176, %v2211
  %2213 = vdwg.mxu0
  %v2215 = vsel %vm346, %v2212, 0
  %2217 = vmatpush.msra.mxu0 0.0
  %2218 = vmatpush.msra.mxu0 0.0
  %2219 = vmatpush.msra.mxu0 0.0
  %2220 = vmatpush.msra.mxu0 0.0
  %2221 = vmatpush.msra.mxu0 0.0
  %2222 = vmatpush.msra.mxu0 0.0
  %2223 = vmatpush.msra.mxu0 0.0
  %2224 = vmatpush.msra.mxu0 0.0
  %2225 = vmatpush.msra.mxu0 0.0
  %2226 = vmatpush.msra.mxu0 0.0
  %2227 = vmatpush.msra.mxu0 0.0
  %2228 = vmatpush.msra.mxu0 0.0
  %2229 = vmatpush.msra.mxu0 0.0
  %2230 = vmatpush.msra.mxu0 0.0
  %2231 = vmatpush.msra.mxu0 %v2171
  %2232 = vmatpush.msra.mxu0 %v2169
  %2233 = vmatmul.f32.gmra.mxu0 %v2215
  %v2234 = vpop.f32.mrf.mxu0
  %v2235 = vadd.f32 0.0, %v2234
  %2236 = vdwg.mxu0
  %2237 = vmatpush.msra.mxu0 0.0
  %2238 = vmatpush.msra.mxu0 0.0
  %2239 = vmatpush.msra.mxu0 0.0
  %2240 = vmatpush.msra.mxu0 0.0
  %2241 = vmatpush.msra.mxu0 0.0
  %2242 = vmatpush.msra.mxu0 0.0
  %2243 = vmatpush.msra.mxu0 0.0
  %2244 = vmatpush.msra.mxu0 0.0
  %2245 = vmatpush.msra.mxu0 0.0
  %2246 = vmatpush.msra.mxu0 0.0
  %2247 = vmatpush.msra.mxu0 0.0
  %2248 = vmatpush.msra.mxu0 0.0
  %2249 = vmatpush.msra.mxu0 0.0
  %2250 = vmatpush.msra.mxu0 0.0
  %2251 = vmatpush.msra.mxu0 %v2172
  %2252 = vmatpush.msra.mxu0 %v2170
  %2253 = vmatmul.f32.gmra.mxu0 %v2215
  %v2254 = vpop.f32.mrf.mxu0
  %v2255 = vadd.f32 0.0, %v2254
  %2256 = vdwg.mxu0
  %v2259 = vrot.slane %v2255, 4
  %vm2260 = vcmask 1043456
  %v2261 = vsel %vm2260, %v2235, %v2259
  %2263 = vst [vmem:[%s21] sm:$0xff] %v2261
  %vm2266 = vcmask 1045504
  %v2267 = vrot.slane %v2164, 2
  %v2268 = vrot.slane %v2165, 2
  %v2269 = vsel %vm2266, %v2267, %v2268
  %v2270 = vrot.slane %v2166, 2
  %v2271 = vsel %vm2266, %v2268, %v2270
  %v2272 = vsel %vm140, %v2269, 0
  %v2274 = vsel %vm140, %v2271, 0
  %2276 = vmatpush.xpose.msra.mxu0 0.0
  %2277 = vmatpush.xpose.msra.mxu0 0.0
  %2278 = vmatpush.xpose.msra.mxu0 0.0
  %2279 = vmatpush.xpose.msra.mxu0 0.0
  %2280 = vmatpush.xpose.msra.mxu0 0.0
  %2281 = vmatpush.xpose.msra.mxu0 0.0
  %2282 = vmatpush.xpose.msra.mxu0 0.0
  %2283 = vmatpush.xpose.msra.mxu0 0.0
  %2284 = vmatpush.xpose.msra.mxu0 0.0
  %2285 = vmatpush.xpose.msra.mxu0 0.0
  %2286 = vmatpush.xpose.msra.mxu0 0.0
  %2287 = vmatpush.xpose.msra.mxu0 0.0
  %2288 = vmatpush.xpose.msra.mxu0 0.0
  %2289 = vmatpush.xpose.msra.mxu0 0.0
  %2290 = vmatpush.xpose.msra.mxu0 %v2274
  %2291 = vmatpush.xpose.msra.mxu0 %v2272
  %2292 = vmatmul.f32.gmra.mxu0 %v2188
  %v2293 = vpop.f32.mrf.mxu0
  %v2294 = vadd.f32 %v2176, %v2293
  %2295 = vdwg.mxu0
  %v2297 = vsel %vm346, %v2294, 0
  %2299 = vmatpush.msra.mxu0 0.0
  %2300 = vmatpush.msra.mxu0 0.0
  %2301 = vmatpush.msra.mxu0 0.0
  %2302 = vmatpush.msra.mxu0 0.0
  %2303 = vmatpush.msra.mxu0 0.0
  %2304 = vmatpush.msra.mxu0 0.0
  %2305 = vmatpush.msra.mxu0 0.0
  %2306 = vmatpush.msra.mxu0 0.0
  %2307 = vmatpush.msra.mxu0 0.0
  %2308 = vmatpush.msra.mxu0 0.0
  %2309 = vmatpush.msra.mxu0 0.0
  %2310 = vmatpush.msra.mxu0 0.0
  %2311 = vmatpush.msra.mxu0 0.0
  %2312 = vmatpush.msra.mxu0 0.0
  %2313 = vmatpush.msra.mxu0 %v2171
  %2314 = vmatpush.msra.mxu0 %v2169
  %2315 = vmatmul.f32.gmra.mxu0 %v2297
  %v2316 = vpop.f32.mrf.mxu0
  %v2317 = vadd.f32 0.0, %v2316
  %2318 = vdwg.mxu0
  %2319 = vmatpush.msra.mxu0 0.0
  %2320 = vmatpush.msra.mxu0 0.0
  %2321 = vmatpush.msra.mxu0 0.0
  %2322 = vmatpush.msra.mxu0 0.0
  %2323 = vmatpush.msra.mxu0 0.0
  %2324 = vmatpush.msra.mxu0 0.0
  %2325 = vmatpush.msra.mxu0 0.0
  %2326 = vmatpush.msra.mxu0 0.0
  %2327 = vmatpush.msra.mxu0 0.0
  %2328 = vmatpush.msra.mxu0 0.0
  %2329 = vmatpush.msra.mxu0 0.0
  %2330 = vmatpush.msra.mxu0 0.0
  %2331 = vmatpush.msra.mxu0 0.0
  %2332 = vmatpush.msra.mxu0 0.0
  %2333 = vmatpush.msra.mxu0 %v2172
  %2334 = vmatpush.msra.mxu0 %v2170
  %2335 = vmatmul.f32.gmra.mxu0 %v2297
  %v2336 = vpop.f32.mrf.mxu0
  %v2337 = vadd.f32 0.0, %v2336
  %2338 = vdwg.mxu0
  %v2341 = vrot.slane %v2337, 4
  %v2342 = vsel %vm2260, %v2317, %v2341
  %s2344 = scalar_lea.vmem %s21, 8
  %2345 = vst [vmem:[%s2344] sm:$0xff] %v2342
  // Predicated region
  $region86: #{segmenter_forward.1} parent=0 // pred_check
    _
  $region87: #{segmenter_forward.1} parent=0 // pred_check_branch
    %2347 = sbr.rel (0) target = $region89
  $region88: #{segmenter_forward.1} parent=0 // pred_region
    _
  $region89: #{segmenter_forward.1} parent=0 // pred_fallthru
    _
  // Predicated region
  $region90: #{segmenter_forward.1} parent=0 // pred_check
    _
  $region91: #{segmenter_forward.1} parent=0 // pred_check_branch
    %2349 = sbr.rel (0) target = $region93
  $region92: #{segmenter_forward.1} parent=0 // pred_region
    _
  $region93: #{segmenter_forward.1} parent=0 // pred_fallthru
    _

</llo_original>
